<compile_context>
chip_gen: v7x
topology: tpu7x:2x2x1
jax: 0.10.0
libtpu: 0.0.40
codegen_flags: <defaults>
</compile_context>

<pallas_src>
import jax
import jax.numpy as jnp
from jax.experimental import pallas as pl
from jax.experimental.pallas import tpu as pltpu

_BN_EPS = 1e-5          # nn.BatchNorm2d default
_LRELU_SLOPE = 0.01     # nn.LeakyReLU default


def conv_bn_lrelu_pool_kernel(p_ref, w_ref, b_ref, g_ref, bt_ref, o_ref, y_scr):
    """Fused Conv2d('same') + BatchNorm2d(batch stats) + LeakyReLU + MaxPool2d(2,2).

    p_ref : VMEM (R, Ck)      im2col patches; R = N*H*W = 4*Rout, rows ordered
                              (dh, dw, n, h_out, w_out) so pool taps are 4 Rout-blocks.
    w_ref : VMEM (Ck, ct)     conv weight tile, Ck = Cin*KH*KW, ct = Cout tile (lanes).
    b_ref : VMEM (1, ct)      conv bias tile.
    g_ref : VMEM (1, ct)      BN gamma tile.
    bt_ref: VMEM (1, ct)      BN beta tile.
    o_ref : VMEM (Rout, ct)   pooled output tile, rows ordered (n, h_out, w_out).
    y_scr : VMEM (R, ct) f32  scratch holding the pre-pool activation.
    """
    # --- convolution on the MXU ------------------------------------------------
    acc = jnp.dot(p_ref[...], w_ref[...], preferred_element_type=jnp.float32)
    acc = acc + b_ref[...]                                    # (R, ct)

    # --- BatchNorm2d, training-mode batch statistics over all N*H*W pixels ------
    mean = jnp.mean(acc, axis=0, keepdims=True)               # (1, ct)
    var = jnp.mean((acc - mean) ** 2, axis=0, keepdims=True)  # biased variance
    y = (acc - mean) * jax.lax.rsqrt(var + _BN_EPS)
    y = y * g_ref[...] + bt_ref[...]

    # --- LeakyReLU ---------------------------------------------------------------
    y = jnp.where(y >= 0, y, _LRELU_SLOPE * y)

    # --- fused 2x2/stride-2 max pool ----------------------------------------------
    # Rows were pre-ordered so the 4 window taps of output row k are rows
    # k, k+Rout, k+2*Rout, k+3*Rout.
    y_scr[...] = y
    r_out = o_ref.shape[0]
    pooled = y_scr[pl.ds(0, r_out), :]
    for q in range(1, 4):
        pooled = jnp.maximum(pooled, y_scr[pl.ds(q * r_out, r_out), :])
    o_ref[...] = pooled


def conv_block(x, w, b, gamma, beta):
    """x: NCHW float32. Returns NCHW float32, shape (N, Cout, H//2, W//2)."""
    N, Cin, H, W = x.shape
    Cout, _, KH, KW = w.shape
    assert H % 2 == 0 and W % 2 == 0, "even spatial dims assumed (MaxPool2d(2,2))"
    ph, pw = KH // 2, KW // 2
    Hout, Wout = H // 2, W // 2
    Ck = Cin * KH * KW
    R = N * H * W
    Rout = N * Hout * Wout

    # ---- wrapper-side layout: im2col with pool-friendly row order ---------------
    xp = jnp.pad(x.astype(jnp.float32), ((0, 0), (0, 0), (ph, ph), (pw, pw)))
    taps = [xp[:, :, kh:kh + H, kw:kw + W]            # each (N, Cin, H, W)
            for kh in range(KH) for kw in range(KW)]
    pat = jnp.stack(taps, axis=0)                      # (KH*KW, N, Cin, H, W)
    pat = pat.reshape(KH * KW, N, Cin, Hout, 2, Wout, 2)
    # axes: (tap, n, ci, ho, dh, wo, dw) -> rows (dh, dw, n, ho, wo), cols (ci, tap)
    pat = jnp.transpose(pat, (4, 6, 1, 3, 5, 2, 0))
    patches = pat.reshape(R, Ck)                       # (R, Ck)

    wt = w.astype(jnp.float32).reshape(Cout, Ck).T     # (Ck, Cout), Cout on lanes
    b2 = b.astype(jnp.float32).reshape(1, Cout)
    g2 = gamma.astype(jnp.float32).reshape(1, Cout)
    bt2 = beta.astype(jnp.float32).reshape(1, Cout)

    # ---- Cout tiling: 128-wide lane-dense tiles when possible, else one block ----
    ct = 128 if Cout % 128 == 0 else Cout
    n_blocks = Cout // ct

    grid_spec = pltpu.PrefetchScalarGridSpec(
        num_scalar_prefetch=0,
        grid=(n_blocks,),
        in_specs=[
            pl.BlockSpec((R, Ck), lambda j: (0, 0)),     # patches (shared across steps)
            pl.BlockSpec((Ck, ct), lambda j: (0, j)),    # conv weight tile
            pl.BlockSpec((1, ct), lambda j: (0, j)),     # bias
            pl.BlockSpec((1, ct), lambda j: (0, j)),     # gamma
            pl.BlockSpec((1, ct), lambda j: (0, j)),     # beta
        ],
        out_specs=pl.BlockSpec((Rout, ct), lambda j: (0, j)),
        scratch_shapes=[pltpu.VMEM((R, ct), jnp.float32)],
    )

    out2d = pl.pallas_call(
        conv_bn_lrelu_pool_kernel,
        out_shape=jax.ShapeDtypeStruct((Rout, Cout), jnp.float32),
        grid_spec=grid_spec,
        compiler_params=pltpu.CompilerParams(
            dimension_semantics=("parallel",),
            vmem_limit_bytes=64 * 1024 * 1024),
    )(patches, wt, b2, g2, bt2)

    # rows are (n, h_out, w_out); back to NCHW
    out = out2d.reshape(N, Hout, Wout, Cout)
    return jnp.transpose(out, (0, 3, 1, 2))


def ref_forward(x, w, b, gamma, beta):
    """Pure-JAX reference replicating the PyTorch module (training-mode BN)."""
    y = jax.lax.conv_general_dilated(
        x, w, window_strides=(1, 1), padding="SAME",
        dimension_numbers=("NCHW", "OIHW", "NCHW"))
    y = y + b[None, :, None, None]
    mean = y.mean(axis=(0, 2, 3), keepdims=True)
    var = ((y - mean) ** 2).mean(axis=(0, 2, 3), keepdims=True)
    y = (y - mean) * jax.lax.rsqrt(var + _BN_EPS)
    y = y * gamma[None, :, None, None] + beta[None, :, None, None]
    y = jnp.where(y >= 0, y, _LRELU_SLOPE * y)
    y = jax.lax.reduce_window(y, -jnp.inf, jax.lax.max,
                              (1, 1, 2, 2), (1, 1, 2, 2), "VALID")
    return y


if __name__ == "__main__":
    N, Cin, Cout, H, W, K = 2, 3, 3, 16, 16, 3

    key = jax.random.PRNGKey(0)
    k_x, k_w, k_b = jax.random.split(key, 3)

    x = jax.random.normal(k_x, (N, Cin, H, W), jnp.float32)

    # Deterministic parameter init (PyTorch-default-style bounds for Conv2d;
    # BatchNorm2d defaults weight=1, bias=0).
    fan_in = Cin * K * K
    bound = 1.0 / (fan_in ** 0.5)
    w = jax.random.uniform(k_w, (Cout, Cin, K, K), jnp.float32, -bound, bound)
    b = jax.random.uniform(k_b, (Cout,), jnp.float32, -bound, bound)
    gamma = jnp.ones((Cout,), jnp.float32)
    beta = jnp.zeros((Cout,), jnp.float32)

    out = jax.block_until_ready(conv_block(x, w, b, gamma, beta))
    ref = jax.block_until_ready(ref_forward(x, w, b, gamma, beta))

    assert out.shape == (N, Cout, H // 2, W // 2), out.shape
    assert bool(jnp.allclose(out, ref, atol=1e-4, rtol=1e-4)), "mismatch vs reference"
    print("KERNEL_OK")
</pallas_src>

<mosaic_0001>
module attributes {stable_mosaic.version = 11 : i64} {
  func.func @conv_bn_lrelu_pool_kernel(%arg0: i32, %arg1: memref<512x27xf32, #tpu.memory_space<vmem>>, %arg2: memref<27x3xf32, #tpu.memory_space<vmem>>, %arg3: memref<1x3xf32, #tpu.memory_space<vmem>>, %arg4: memref<1x3xf32, #tpu.memory_space<vmem>>, %arg5: memref<1x3xf32, #tpu.memory_space<vmem>>, %arg6: memref<128x3xf32, #tpu.memory_space<vmem>>, %arg7: memref<512x3xf32, #tpu.memory_space<vmem>>) attributes {dimension_semantics = [#tpu.dimension_semantics<parallel>], iteration_bounds = array<i64: 1>, scalar_prefetch = 0 : i64, scratch_operands = 1 : i64, tpu.core_type = #tpu.core_type<tc>, window_params = [{pipeline_mode = #tpu.pipeline_mode<synchronous>, transform_indices = @transform_0, window_bounds = array<i64: 512, 27>}, {transform_indices = @transform_1, window_bounds = array<i64: 27, 3>}, {transform_indices = @transform_2, window_bounds = array<i64: 1, 3>}, {transform_indices = @transform_3, window_bounds = array<i64: 1, 3>}, {transform_indices = @transform_4, window_bounds = array<i64: 1, 3>}, {transform_indices = @transform_5, window_bounds = array<i64: 128, 3>}]} {
    %c0 = arith.constant 0 : index
    %c0_0 = arith.constant 0 : index
    %0 = vector.load %arg1[%c0, %c0_0] : memref<512x27xf32, #tpu.memory_space<vmem>>, vector<512x27xf32>
    %c0_1 = arith.constant 0 : index
    %c0_2 = arith.constant 0 : index
    %1 = vector.load %arg2[%c0_1, %c0_2] : memref<27x3xf32, #tpu.memory_space<vmem>>, vector<27x3xf32>
    %cst = arith.constant dense<0.000000e+00> : vector<512x3xf32>
    %2 = tpu.matmul %0, %1, %cst {dimension_numbers = #tpu.dot_dimension_numbers<[1], [0], [0], [1], [0, 0, 1, 1], [], []>} : vector<512x27xf32>, vector<27x3xf32>, vector<512x3xf32> -> vector<512x3xf32>
    %c0_3 = arith.constant 0 : index
    %c0_4 = arith.constant 0 : index
    %3 = vector.load %arg3[%c0_3, %c0_4] : memref<1x3xf32, #tpu.memory_space<vmem>>, vector<1x3xf32>
    %4 = vector.broadcast %3 : vector<1x3xf32> to vector<512x3xf32>
    %5 = arith.addf %2, %4 : vector<512x3xf32>
    %cst_5 = arith.constant dense<0.000000e+00> : vector<3xf32>
    %6 = vector.multi_reduction <add>, %5, %cst_5 [0] : vector<512x3xf32> to vector<3xf32>
    %7 = vector.shape_cast %6 : vector<3xf32> to vector<1x3xf32>
    %cst_6 = arith.constant 5.120000e+02 : f32
    %8 = vector.broadcast %cst_6 : f32 to vector<1x3xf32>
    %9 = arith.divf %7, %8 : vector<1x3xf32>
    %10 = vector.broadcast %9 : vector<1x3xf32> to vector<512x3xf32>
    %11 = arith.subf %5, %10 : vector<512x3xf32>
    %12 = arith.mulf %11, %11 : vector<512x3xf32>
    %cst_7 = arith.constant dense<0.000000e+00> : vector<3xf32>
    %13 = vector.multi_reduction <add>, %12, %cst_7 [0] : vector<512x3xf32> to vector<3xf32>
    %14 = vector.shape_cast %13 : vector<3xf32> to vector<1x3xf32>
    %cst_8 = arith.constant 5.120000e+02 : f32
    %15 = vector.broadcast %cst_8 : f32 to vector<1x3xf32>
    %16 = arith.divf %14, %15 : vector<1x3xf32>
    %17 = vector.broadcast %9 : vector<1x3xf32> to vector<512x3xf32>
    %18 = arith.subf %5, %17 : vector<512x3xf32>
    %cst_9 = arith.constant 9.99999974E-6 : f32
    %19 = vector.broadcast %cst_9 : f32 to vector<1x3xf32>
    %20 = arith.addf %16, %19 : vector<1x3xf32>
    %21 = math.rsqrt %20 : vector<1x3xf32>
    %22 = vector.broadcast %21 : vector<1x3xf32> to vector<512x3xf32>
    %23 = arith.mulf %18, %22 : vector<512x3xf32>
    %c0_10 = arith.constant 0 : index
    %c0_11 = arith.constant 0 : index
    %24 = vector.load %arg4[%c0_10, %c0_11] : memref<1x3xf32, #tpu.memory_space<vmem>>, vector<1x3xf32>
    %25 = vector.broadcast %24 : vector<1x3xf32> to vector<512x3xf32>
    %26 = arith.mulf %23, %25 : vector<512x3xf32>
    %c0_12 = arith.constant 0 : index
    %c0_13 = arith.constant 0 : index
    %27 = vector.load %arg5[%c0_12, %c0_13] : memref<1x3xf32, #tpu.memory_space<vmem>>, vector<1x3xf32>
    %28 = vector.broadcast %27 : vector<1x3xf32> to vector<512x3xf32>
    %29 = arith.addf %26, %28 : vector<512x3xf32>
    %cst_14 = arith.constant 0.000000e+00 : f32
    %30 = vector.broadcast %cst_14 : f32 to vector<512x3xf32>
    %31 = arith.cmpf oge, %29, %30 : vector<512x3xf32>
    %cst_15 = arith.constant 0.00999999977 : f32
    %32 = vector.broadcast %cst_15 : f32 to vector<512x3xf32>
    %33 = arith.mulf %32, %29 : vector<512x3xf32>
    %34 = arith.select %31, %29, %33 : vector<512x3xi1>, vector<512x3xf32>
    %c0_16 = arith.constant 0 : index
    %c0_17 = arith.constant 0 : index
    %35 = vector.load %arg7[%c0_16, %c0_17] : memref<512x3xf32, #tpu.memory_space<vmem>>, vector<512x3xf32>
    tpu.vector_store %arg7[%c0_16, %c0_17], %34 {strides = array<i32>} : memref<512x3xf32, #tpu.memory_space<vmem>>, vector<512x3xf32>,
    %c0_18 = arith.constant 0 : index
    %c0_19 = arith.constant 0 : index
    %36 = vector.load %arg7[%c0_18, %c0_19] : memref<512x3xf32, #tpu.memory_space<vmem>>, vector<128x3xf32>
    %c128 = arith.constant 128 : index
    %c0_20 = arith.constant 0 : index
    %37 = vector.load %arg7[%c128, %c0_20] : memref<512x3xf32, #tpu.memory_space<vmem>>, vector<128x3xf32>
    %38 = arith.maximumf %36, %37 : vector<128x3xf32>
    %c256 = arith.constant 256 : index
    %c0_21 = arith.constant 0 : index
    %39 = vector.load %arg7[%c256, %c0_21] : memref<512x3xf32, #tpu.memory_space<vmem>>, vector<128x3xf32>
    %40 = arith.maximumf %38, %39 : vector<128x3xf32>
    %c384 = arith.constant 384 : index
    %c0_22 = arith.constant 0 : index
    %41 = vector.load %arg7[%c384, %c0_22] : memref<512x3xf32, #tpu.memory_space<vmem>>, vector<128x3xf32>
    %42 = arith.maximumf %40, %41 : vector<128x3xf32>
    %c0_23 = arith.constant 0 : index
    %c0_24 = arith.constant 0 : index
    %43 = vector.load %arg6[%c0_23, %c0_24] : memref<128x3xf32, #tpu.memory_space<vmem>>, vector<128x3xf32>
    tpu.vector_store %arg6[%c0_23, %c0_24], %42 {strides = array<i32>} : memref<128x3xf32, #tpu.memory_space<vmem>>, vector<128x3xf32>,
    return
  }
  func.func @transform_0(%arg0: i32) -> (i32, i32) {
    %c0_i32 = arith.constant 0 : i32
    %c0_i32_0 = arith.constant 0 : i32
    %c0_i32_1 = arith.constant 0 : i32
    return %c0_i32, %c0_i32_0 : i32, i32
  }
  func.func @transform_1(%arg0: i32) -> (i32, i32) {
    %c0_i32 = arith.constant 0 : i32
    %c0_i32_0 = arith.constant 0 : i32
    return %c0_i32, %arg0 : i32, i32
  }
  func.func @transform_2(%arg0: i32) -> (i32, i32) {
    %c0_i32 = arith.constant 0 : i32
    %c0_i32_0 = arith.constant 0 : i32
    return %c0_i32, %arg0 : i32, i32
  }
  func.func @transform_3(%arg0: i32) -> (i32, i32) {
    %c0_i32 = arith.constant 0 : i32
    %c0_i32_0 = arith.constant 0 : i32
    return %c0_i32, %arg0 : i32, i32
  }
  func.func @transform_4(%arg0: i32) -> (i32, i32) {
    %c0_i32 = arith.constant 0 : i32
    %c0_i32_0 = arith.constant 0 : i32
    return %c0_i32, %arg0 : i32, i32
  }
  func.func @transform_5(%arg0: i32) -> (i32, i32) {
    %c0_i32 = arith.constant 0 : i32
    %c0_i32_0 = arith.constant 0 : i32
    return %c0_i32, %arg0 : i32, i32
  }
}

</mosaic_0001>

<llo_original>
// kernel: tpu_custom_call.1
$region0: #{tpu_custom_call.1}
  #allocation0 [shape = 'u32[]', space=smem, size = 0x4, offset = 0x4, fixed_abs, tag = 'smem constant byte address 0x4 - core index']
  #allocation1 [shape = 'u32[144,128]{1,0:T(1,128)}', space=vmem, size = 0x12000, scoped, tag = 'internal scratch']
  #allocation2 [shape = 'f32[512,3]{1,0:T(8,128)}', space=vmem, size = 0x40000, scoped, tag = 'scratch operand']
  %s0 = inlined_call_operand.hbm [shape: f32[512,27], index: 0, kind: input, shape index: {}]
  %s1 = inlined_call_operand.hbm [shape: f32[27,3], index: 1, kind: input, shape index: {}]
  %s2 = inlined_call_operand.hbm [shape: f32[1,3], index: 2, kind: input, shape index: {}]
  %s3 = inlined_call_operand.hbm [shape: f32[1,3], index: 3, kind: input, shape index: {}]
  %s4 = inlined_call_operand.hbm [shape: f32[1,3], index: 4, kind: input, shape index: {}]
  %s5 = inlined_call_operand.hbm [shape: f32[128,3], index: 5, kind: output, shape index: {}]
  %s6 = sld [smem:[#allocation0]]
  $region50: #{tpu_custom_call.1} parent=0
    _
  %s8 = ssub.s32 1, %s6
  %s9 = scalar_select 0, %s8, %s6
  $region1: #{tpu_custom_call.1} parent=0
    #allocation3 [shape = 'u8[262144]{0}', space=vmem, size = 0x40000, scoped, tag = 'input window, operand 0, single buffered']
    #allocation4 [shape = 's32[1]{0}', space=sflag, size = 0x4, scoped, tag = 'scoped memory for tpu_custom_call.1']
    #allocation5 [shape = 's32[1]{0}', space=sflag, size = 0x4, scoped, tag = 'scoped memory for tpu_custom_call.1']
    #allocation6 [shape = 'u8[16384]{0}', space=vmem, size = 0x4000, scoped, tag = 'input window, operand 1, single buffered']
    #allocation7 [shape = 's32[1]{0}', space=sflag, size = 0x4, scoped, tag = 'scoped memory for tpu_custom_call.1']
    #allocation8 [shape = 'u8[512]{0}', space=vmem, size = 0x400, scoped, tag = 'input window, operand 2, single buffered']
    #allocation9 [shape = 'u8[512]{0}', space=vmem, size = 0x400, scoped, tag = 'input window, operand 3, single buffered']
    #allocation10 [shape = 's32[1]{0}', space=sflag, size = 0x4, scoped, tag = 'scoped memory for tpu_custom_call.1']
    #allocation11 [shape = 'u8[512]{0}', space=vmem, size = 0x400, scoped, tag = 'input window, operand 4, single buffered']
    #allocation12 [shape = 'u8[65536]{0}', space=vmem, size = 0x10000, scoped, tag = 'output window, operand 0, single buffered']
    %10 = vsyncpa [#allocation4], 0
    %11 = vsyncpa [#allocation7], 0
    %12 = vsyncpa [#allocation10], 0
    %13 = vsyncpa [#allocation5], 0
    // Predicated region
    $region2: #{tpu_custom_call.1} parent=1 // pred_check
      _
    $region3: #{tpu_custom_call.1} parent=1 // pred_check_branch
      %15 = sbr.rel (0) target = $region5
    $region4: #{tpu_custom_call.1} parent=1 // pred_region
      %s17 = ssub.s32 8192, 8192
      %18 = vsyncadd [#allocation4], %s17
      %s19 = sshll.u32 [#allocation3], 4
      %s20 = int_to_ptr.vmem [resolvable:$true] %s19
      %25 = dma.hbm_to_vmem [thread:$0]  %s0, 8192, %s20, [#allocation4], 128, 128, 8
    $region5: #{tpu_custom_call.1} parent=1 // pred_fallthru
      _
    // Predicated region
    $region6: #{tpu_custom_call.1} parent=1 // pred_check
      _
    $region7: #{tpu_custom_call.1} parent=1 // pred_check_branch
      %27 = sbr.rel (0) target = $region9
    $region8: #{tpu_custom_call.1} parent=1 // pred_region
      %s29 = ssub.s32 512, 512
      %30 = vsyncadd [#allocation7], %s29
      %s31 = sshll.u32 [#allocation6], 4
      %s32 = int_to_ptr.vmem [resolvable:$true] %s31
      %37 = dma.hbm_to_vmem [thread:$0]  %s1, 512, %s32, [#allocation7], 128, 128, 8
    $region9: #{tpu_custom_call.1} parent=1 // pred_fallthru
      _
    // Predicated region
    $region10: #{tpu_custom_call.1} parent=1 // pred_check
      _
    $region11: #{tpu_custom_call.1} parent=1 // pred_check_branch
      %39 = sbr.rel (0) target = $region13
    $region12: #{tpu_custom_call.1} parent=1 // pred_region
      %s41 = ssub.s32 16, 16
      %42 = vsyncadd [#allocation7], %s41
      %s44 = sshll.u32 [#allocation8], 4
      %s45 = int_to_ptr.vmem [resolvable:$true] %s44
      %47 = dma.hbm_to_vmem [thread:$0]  %s2, 16, %s45, [#allocation7]
    $region13: #{tpu_custom_call.1} parent=1 // pred_fallthru
      _
    // Predicated region
    $region14: #{tpu_custom_call.1} parent=1 // pred_check
      _
    $region15: #{tpu_custom_call.1} parent=1 // pred_check_branch
      %49 = sbr.rel (0) target = $region17
    $region16: #{tpu_custom_call.1} parent=1 // pred_region
      %s51 = ssub.s32 16, 16
      %52 = vsyncadd [#allocation10], %s51
      %s54 = sshll.u32 [#allocation9], 4
      %s55 = int_to_ptr.vmem [resolvable:$true] %s54
      %57 = dma.hbm_to_vmem [thread:$0]  %s3, 16, %s55, [#allocation10]
    $region17: #{tpu_custom_call.1} parent=1 // pred_fallthru
      _
    // Predicated region
    $region18: #{tpu_custom_call.1} parent=1 // pred_check
      _
    $region19: #{tpu_custom_call.1} parent=1 // pred_check_branch
      %59 = sbr.rel (0) target = $region21
    $region20: #{tpu_custom_call.1} parent=1 // pred_region
      %s61 = ssub.s32 16, 16
      %62 = vsyncadd [#allocation10], %s61
      %s64 = sshll.u32 [#allocation11], 4
      %s65 = int_to_ptr.vmem [resolvable:$true] %s64
      %67 = dma.hbm_to_vmem [thread:$0]  %s4, 16, %s65, [#allocation10]
    $region21: #{tpu_custom_call.1} parent=1 // pred_fallthru
      _
    // Predicated region
    $region22: #{tpu_custom_call.1} parent=1 // pred_check
      _
    $region23: #{tpu_custom_call.1} parent=1 // pred_check_branch
      %69 = sbr.rel (0) target = $region25
    $region24: #{tpu_custom_call.1} parent=1 // pred_region
      %70 = dma.done [#allocation4], 8192
    $region25: #{tpu_custom_call.1} parent=1 // pred_fallthru
      _
    // Predicated region
    $region26: #{tpu_custom_call.1} parent=1 // pred_check
      _
    $region27: #{tpu_custom_call.1} parent=1 // pred_check_branch
      %72 = sbr.rel (0) target = $region29
    $region28: #{tpu_custom_call.1} parent=1 // pred_region
      %73 = dma.done [#allocation7], 512
    $region29: #{tpu_custom_call.1} parent=1 // pred_fallthru
      _
    // Predicated region
    $region30: #{tpu_custom_call.1} parent=1 // pred_check
      _
    $region31: #{tpu_custom_call.1} parent=1 // pred_check_branch
      %75 = sbr.rel (0) target = $region33
    $region32: #{tpu_custom_call.1} parent=1 // pred_region
      %76 = dma.done [#allocation7], 16
    $region33: #{tpu_custom_call.1} parent=1 // pred_fallthru
      _
    // Predicated region
    $region34: #{tpu_custom_call.1} parent=1 // pred_check
      _
    $region35: #{tpu_custom_call.1} parent=1 // pred_check_branch
      %78 = sbr.rel (0) target = $region37
    $region36: #{tpu_custom_call.1} parent=1 // pred_region
      %79 = dma.done [#allocation10], 16
    $region37: #{tpu_custom_call.1} parent=1 // pred_fallthru
      _
    // Predicated region
    $region38: #{tpu_custom_call.1} parent=1 // pred_check
      _
    $region39: #{tpu_custom_call.1} parent=1 // pred_check_branch
      %81 = sbr.rel (0) target = $region41
    $region40: #{tpu_custom_call.1} parent=1 // pred_region
      %82 = dma.done [#allocation10], 16
    $region41: #{tpu_custom_call.1} parent=1 // pred_fallthru
      _
    %v83 = vld [vmem:[#allocation3] sm:$0xff]
    %v84 = vld [vmem:[#allocation3 + $0x8] sm:$0xff]
    %v85 = vld [vmem:[#allocation3 + $0x10] sm:$0xff]
    %v86 = vld [vmem:[#allocation3 + $0x18] sm:$0xff]
    %v87 = vld [vmem:[#allocation3 + $0x20] sm:$0xff]
    %v88 = vld [vmem:[#allocation3 + $0x28] sm:$0xff]
    %v89 = vld [vmem:[#allocation3 + $0x30] sm:$0xff]
    %v90 = vld [vmem:[#allocation3 + $0x38] sm:$0xff]
    %v91 = vld [vmem:[#allocation3 + $0x40] sm:$0xff]
    %v92 = vld [vmem:[#allocation3 + $0x48] sm:$0xff]
    %v93 = vld [vmem:[#allocation3 + $0x50] sm:$0xff]
    %v94 = vld [vmem:[#allocation3 + $0x58] sm:$0xff]
    %v95 = vld [vmem:[#allocation3 + $0x60] sm:$0xff]
    %v96 = vld [vmem:[#allocation3 + $0x68] sm:$0xff]
    %v97 = vld [vmem:[#allocation3 + $0x70] sm:$0xff]
    %v98 = vld [vmem:[#allocation3 + $0x78] sm:$0xff]
    %v99 = vld [vmem:[#allocation3 + $0x80] sm:$0xff]
    %v100 = vld [vmem:[#allocation3 + $0x88] sm:$0xff]
    %v101 = vld [vmem:[#allocation3 + $0x90] sm:$0xff]
    %v102 = vld [vmem:[#allocation3 + $0x98] sm:$0xff]
    %v103 = vld [vmem:[#allocation3 + $0xa0] sm:$0xff]
    %v104 = vld [vmem:[#allocation3 + $0xa8] sm:$0xff]
    %v105 = vld [vmem:[#allocation3 + $0xb0] sm:$0xff]
    %v106 = vld [vmem:[#allocation3 + $0xb8] sm:$0xff]
    %v107 = vld [vmem:[#allocation3 + $0xc0] sm:$0xff]
    %v108 = vld [vmem:[#allocation3 + $0xc8] sm:$0xff]
    %v109 = vld [vmem:[#allocation3 + $0xd0] sm:$0xff]
    %v110 = vld [vmem:[#allocation3 + $0xd8] sm:$0xff]
    %v111 = vld [vmem:[#allocation3 + $0xe0] sm:$0xff]
    %v112 = vld [vmem:[#allocation3 + $0xe8] sm:$0xff]
    %v113 = vld [vmem:[#allocation3 + $0xf0] sm:$0xff]
    %v114 = vld [vmem:[#allocation3 + $0xf8] sm:$0xff]
    %v115 = vld [vmem:[#allocation3 + $0x100] sm:$0xff]
    %v116 = vld [vmem:[#allocation3 + $0x108] sm:$0xff]
    %v117 = vld [vmem:[#allocation3 + $0x110] sm:$0xff]
    %v118 = vld [vmem:[#allocation3 + $0x118] sm:$0xff]
    %v119 = vld [vmem:[#allocation3 + $0x120] sm:$0xff]
    %v120 = vld [vmem:[#allocation3 + $0x128] sm:$0xff]
    %v121 = vld [vmem:[#allocation3 + $0x130] sm:$0xff]
    %v122 = vld [vmem:[#allocation3 + $0x138] sm:$0xff]
    %v123 = vld [vmem:[#allocation3 + $0x140] sm:$0xff]
    %v124 = vld [vmem:[#allocation3 + $0x148] sm:$0xff]
    %v125 = vld [vmem:[#allocation3 + $0x150] sm:$0xff]
    %v126 = vld [vmem:[#allocation3 + $0x158] sm:$0xff]
    %v127 = vld [vmem:[#allocation3 + $0x160] sm:$0xff]
    %v128 = vld [vmem:[#allocation3 + $0x168] sm:$0xff]
    %v129 = vld [vmem:[#allocation3 + $0x170] sm:$0xff]
    %v130 = vld [vmem:[#allocation3 + $0x178] sm:$0xff]
    %v131 = vld [vmem:[#allocation3 + $0x180] sm:$0xff]
    %v132 = vld [vmem:[#allocation3 + $0x188] sm:$0xff]
    %v133 = vld [vmem:[#allocation3 + $0x190] sm:$0xff]
    %v134 = vld [vmem:[#allocation3 + $0x198] sm:$0xff]
    %v135 = vld [vmem:[#allocation3 + $0x1a0] sm:$0xff]
    %v136 = vld [vmem:[#allocation3 + $0x1a8] sm:$0xff]
    %v137 = vld [vmem:[#allocation3 + $0x1b0] sm:$0xff]
    %v138 = vld [vmem:[#allocation3 + $0x1b8] sm:$0xff]
    %v139 = vld [vmem:[#allocation3 + $0x1c0] sm:$0xff]
    %v140 = vld [vmem:[#allocation3 + $0x1c8] sm:$0xff]
    %v141 = vld [vmem:[#allocation3 + $0x1d0] sm:$0xff]
    %v142 = vld [vmem:[#allocation3 + $0x1d8] sm:$0xff]
    %v143 = vld [vmem:[#allocation3 + $0x1e0] sm:$0xff]
    %v144 = vld [vmem:[#allocation3 + $0x1e8] sm:$0xff]
    %v145 = vld [vmem:[#allocation3 + $0x1f0] sm:$0xff]
    %v146 = vld [vmem:[#allocation3 + $0x1f8] sm:$0xff]
    %v147 = vld [vmem:[#allocation6] sm:$0xff]
    %v148 = vld [vmem:[#allocation6 + $0x8] sm:$0xff]
    %v149 = vld [vmem:[#allocation6 + $0x10] sm:$0xff]
    %v150 = vld [vmem:[#allocation6 + $0x18] sm:$0x7]
    %v151 = vld [vmem:[#allocation8] sm:$0x1]
    %v153 = vlaneseq
    %v154 = vshrl.u32 %v153, 7
    %v155 = vsub.s32 0, %v154
    %v156 = vrot.slane %v151, %v155
    %vm158 = vcmask 220160
    %v160 = vsel %vm158, %v83, 0
    %v163 = vsel %vm158, %v84, 0
    %v166 = vsel %vm158, %v85, 0
    %v169 = vsel %vm158, %v86, 0
    %v172 = vsel %vm158, %v87, 0
    %v175 = vsel %vm158, %v88, 0
    %v178 = vsel %vm158, %v89, 0
    %v181 = vsel %vm158, %v90, 0
    %v184 = vsel %vm158, %v91, 0
    %v187 = vsel %vm158, %v92, 0
    %v190 = vsel %vm158, %v93, 0
    %v193 = vsel %vm158, %v94, 0
    %v196 = vsel %vm158, %v95, 0
    %v199 = vsel %vm158, %v96, 0
    %v202 = vsel %vm158, %v97, 0
    %v205 = vsel %vm158, %v98, 0
    %v208 = vsel %vm158, %v99, 0
    %v211 = vsel %vm158, %v100, 0
    %v214 = vsel %vm158, %v101, 0
    %v217 = vsel %vm158, %v102, 0
    %v220 = vsel %vm158, %v103, 0
    %v223 = vsel %vm158, %v104, 0
    %v226 = vsel %vm158, %v105, 0
    %v229 = vsel %vm158, %v106, 0
    %v232 = vsel %vm158, %v107, 0
    %v235 = vsel %vm158, %v108, 0
    %v238 = vsel %vm158, %v109, 0
    %v241 = vsel %vm158, %v110, 0
    %v244 = vsel %vm158, %v111, 0
    %v247 = vsel %vm158, %v112, 0
    %v250 = vsel %vm158, %v113, 0
    %v253 = vsel %vm158, %v114, 0
    %v256 = vsel %vm158, %v115, 0
    %v259 = vsel %vm158, %v116, 0
    %v262 = vsel %vm158, %v117, 0
    %v265 = vsel %vm158, %v118, 0
    %v268 = vsel %vm158, %v119, 0
    %v271 = vsel %vm158, %v120, 0
    %v274 = vsel %vm158, %v121, 0
    %v277 = vsel %vm158, %v122, 0
    %v280 = vsel %vm158, %v123, 0
    %v283 = vsel %vm158, %v124, 0
    %v286 = vsel %vm158, %v125, 0
    %v289 = vsel %vm158, %v126, 0
    %v292 = vsel %vm158, %v127, 0
    %v295 = vsel %vm158, %v128, 0
    %v298 = vsel %vm158, %v129, 0
    %v301 = vsel %vm158, %v130, 0
    %v304 = vsel %vm158, %v131, 0
    %v307 = vsel %vm158, %v132, 0
    %v310 = vsel %vm158, %v133, 0
    %v313 = vsel %vm158, %v134, 0
    %v316 = vsel %vm158, %v135, 0
    %v319 = vsel %vm158, %v136, 0
    %v322 = vsel %vm158, %v137, 0
    %v325 = vsel %vm158, %v138, 0
    %v328 = vsel %vm158, %v139, 0
    %v331 = vsel %vm158, %v140, 0
    %v334 = vsel %vm158, %v141, 0
    %v337 = vsel %vm158, %v142, 0
    %v340 = vsel %vm158, %v143, 0
    %v343 = vsel %vm158, %v144, 0
    %v346 = vsel %vm158, %v145, 0
    %v349 = vsel %vm158, %v146, 0
    %vm351 = vcmask 1042432
    %v353 = vsel %vm351, %v150, 0
    %355 = vmatprep.subr.mxu0 0.0
    %356 = vmatpush1.msra.mxu0 %v147
    %357 = vmatprep.subr.mxu0 0.0
    %358 = vmatpush1.msra.mxu0 %v148
    %359 = vmatprep.subr.mxu0 0.0
    %360 = vmatpush1.msra.mxu0 %v149
    %361 = vmatprep.subr.mxu0 0.0
    %362 = vmatpush1.msra.mxu0 %v353
    %363 = vmatprep.subr.mxu0 0.0
    %364 = vmatpush1.msra.mxu0 0.0
    %365 = vmatprep.subr.mxu0 0.0
    %366 = vmatpush1.msra.mxu0 0.0
    %367 = vmatprep.subr.mxu0 0.0
    %368 = vmatpush1.msra.mxu0 0.0
    %369 = vmatprep.subr.mxu0 0.0
    %370 = vmatpush1.msra.mxu0 0.0
    %371 = vmatprep.subr.mxu0 0.0
    %372 = vmatpush1.msra.mxu0 0.0
    %373 = vmatprep.subr.mxu0 0.0
    %374 = vmatpush1.msra.mxu0 0.0
    %375 = vmatprep.subr.mxu0 0.0
    %376 = vmatpush1.msra.mxu0 0.0
    %377 = vmatprep.subr.mxu0 0.0
    %378 = vmatpush1.msra.mxu0 0.0
    %379 = vmatprep.subr.mxu0 0.0
    %380 = vmatpush1.msra.mxu0 0.0
    %381 = vmatprep.subr.mxu0 0.0
    %382 = vmatpush1.msra.mxu0 0.0
    %383 = vmatprep.subr.mxu0 0.0
    %384 = vmatpush1.msra.mxu0 0.0
    %385 = vmatprep.subr.mxu0 0.0
    %386 = vmatpush1.msra.mxu0 0.0
    %387 = vmatprep.subr.mxu0 0.0
    %388 = vmatpush1.msra.mxu0 0.0
    %389 = vmatprep.subr.mxu0 0.0
    %390 = vmatpush1.msra.mxu0 0.0
    %391 = vmatprep.subr.mxu0 0.0
    %392 = vmatpush1.msra.mxu0 0.0
    %393 = vmatprep.subr.mxu0 0.0
    %394 = vmatpush1.msra.mxu0 0.0
    %395 = vmatprep.subr.mxu0 0.0
    %396 = vmatpush1.msra.mxu0 0.0
    %397 = vmatprep.subr.mxu0 0.0
    %398 = vmatpush1.msra.mxu0 0.0
    %399 = vmatprep.subr.mxu0 0.0
    %400 = vmatpush1.msra.mxu0 0.0
    %401 = vmatprep.subr.mxu0 0.0
    %402 = vmatpush1.msra.mxu0 0.0
    %403 = vmatprep.subr.mxu0 0.0
    %404 = vmatpush1.msra.mxu0 0.0
    %405 = vmatprep.subr.mxu0 0.0
    %406 = vmatpush1.msra.mxu0 0.0
    %407 = vmatprep.subr.mxu0 0.0
    %408 = vmatpush1.msra.mxu0 0.0
    %409 = vmatprep.subr.mxu0 0.0
    %410 = vmatpush1.msra.mxu0 0.0
    %411 = vmatprep.subr.mxu0 0.0
    %412 = vmatpush1.msra.mxu0 0.0
    %413 = vmatprep.subr.mxu0 0.0
    %414 = vmatpush1.msra.mxu0 0.0
    %415 = vmatprep.subr.mxu0 0.0
    %416 = vmatpush1.msra.mxu0 0.0
    %417 = vmatprep.subr.mxu0 0.0
    %418 = vmatpush1.msra.mxu0 0.0
    %419 = vmatprep.mubr.f32.mxu0 0.0
    %420 = vmatmul.mubr.f32.gmra.mrb[0].mxu0 %v160
    %v421 = vpop.f32.mrb[0].mxu0
    %v422 = vadd.f32 %v156, %v421
    %v423 = vpop.f32.mrb[0].mxu0
    %424 = vmatprep.mubr.f32.mxu0 0.0
    %425 = vmatmul.mubr.f32.gmra.mrb[0].mxu0 %v163
    %v426 = vpop.f32.mrb[0].mxu0
    %v427 = vadd.f32 %v156, %v426
    %v428 = vpop.f32.mrb[0].mxu0
    %429 = vmatprep.mubr.f32.mxu0 0.0
    %430 = vmatmul.mubr.f32.gmra.mrb[0].mxu0 %v166
    %v431 = vpop.f32.mrb[0].mxu0
    %v432 = vadd.f32 %v156, %v431
    %v433 = vpop.f32.mrb[0].mxu0
    %434 = vmatprep.mubr.f32.mxu0 0.0
    %435 = vmatmul.mubr.f32.gmra.mrb[0].mxu0 %v169
    %v436 = vpop.f32.mrb[0].mxu0
    %v437 = vadd.f32 %v156, %v436
    %v438 = vpop.f32.mrb[0].mxu0
    %439 = vmatprep.mubr.f32.mxu0 0.0
    %440 = vmatmul.mubr.f32.gmra.mrb[0].mxu0 %v172
    %v441 = vpop.f32.mrb[0].mxu0
    %v442 = vadd.f32 %v156, %v441
    %v443 = vpop.f32.mrb[0].mxu0
    %444 = vmatprep.mubr.f32.mxu0 0.0
    %445 = vmatmul.mubr.f32.gmra.mrb[0].mxu0 %v175
    %v446 = vpop.f32.mrb[0].mxu0
    %v447 = vadd.f32 %v156, %v446
    %v448 = vpop.f32.mrb[0].mxu0
    %449 = vmatprep.mubr.f32.mxu0 0.0
    %450 = vmatmul.mubr.f32.gmra.mrb[0].mxu0 %v178
    %v451 = vpop.f32.mrb[0].mxu0
    %v452 = vadd.f32 %v156, %v451
    %v453 = vpop.f32.mrb[0].mxu0
    %454 = vmatprep.mubr.f32.mxu0 0.0
    %455 = vmatmul.mubr.f32.gmra.mrb[0].mxu0 %v181
    %v456 = vpop.f32.mrb[0].mxu0
    %v457 = vadd.f32 %v156, %v456
    %v458 = vpop.f32.mrb[0].mxu0
    %459 = vmatprep.mubr.f32.mxu0 0.0
    %460 = vmatmul.mubr.f32.gmra.mrb[0].mxu0 %v184
    %v461 = vpop.f32.mrb[0].mxu0
    %v462 = vadd.f32 %v156, %v461
    %v463 = vpop.f32.mrb[0].mxu0
    %464 = vmatprep.mubr.f32.mxu0 0.0
    %465 = vmatmul.mubr.f32.gmra.mrb[0].mxu0 %v187
    %v466 = vpop.f32.mrb[0].mxu0
    %v467 = vadd.f32 %v156, %v466
    %v468 = vpop.f32.mrb[0].mxu0
    %469 = vmatprep.mubr.f32.mxu0 0.0
    %470 = vmatmul.mubr.f32.gmra.mrb[0].mxu0 %v190
    %v471 = vpop.f32.mrb[0].mxu0
    %v472 = vadd.f32 %v156, %v471
    %v473 = vpop.f32.mrb[0].mxu0
    %474 = vmatprep.mubr.f32.mxu0 0.0
    %475 = vmatmul.mubr.f32.gmra.mrb[0].mxu0 %v193
    %v476 = vpop.f32.mrb[0].mxu0
    %v477 = vadd.f32 %v156, %v476
    %v478 = vpop.f32.mrb[0].mxu0
    %479 = vmatprep.mubr.f32.mxu0 0.0
    %480 = vmatmul.mubr.f32.gmra.mrb[0].mxu0 %v196
    %v481 = vpop.f32.mrb[0].mxu0
    %v482 = vadd.f32 %v156, %v481
    %v483 = vpop.f32.mrb[0].mxu0
    %484 = vmatprep.mubr.f32.mxu0 0.0
    %485 = vmatmul.mubr.f32.gmra.mrb[0].mxu0 %v199
    %v486 = vpop.f32.mrb[0].mxu0
    %v487 = vadd.f32 %v156, %v486
    %v488 = vpop.f32.mrb[0].mxu0
    %489 = vmatprep.mubr.f32.mxu0 0.0
    %490 = vmatmul.mubr.f32.gmra.mrb[0].mxu0 %v202
    %v491 = vpop.f32.mrb[0].mxu0
    %v492 = vadd.f32 %v156, %v491
    %v493 = vpop.f32.mrb[0].mxu0
    %494 = vmatprep.mubr.f32.mxu0 0.0
    %495 = vmatmul.mubr.f32.gmra.mrb[0].mxu0 %v205
    %v496 = vpop.f32.mrb[0].mxu0
    %v497 = vadd.f32 %v156, %v496
    %v498 = vpop.f32.mrb[0].mxu0
    %499 = vmatprep.mubr.f32.mxu0 0.0
    %500 = vmatmul.mubr.f32.gmra.mrb[0].mxu0 %v208
    %v501 = vpop.f32.mrb[0].mxu0
    %v502 = vadd.f32 %v156, %v501
    %v503 = vpop.f32.mrb[0].mxu0
    %504 = vmatprep.mubr.f32.mxu0 0.0
    %505 = vmatmul.mubr.f32.gmra.mrb[0].mxu0 %v211
    %v506 = vpop.f32.mrb[0].mxu0
    %v507 = vadd.f32 %v156, %v506
    %v508 = vpop.f32.mrb[0].mxu0
    %509 = vmatprep.mubr.f32.mxu0 0.0
    %510 = vmatmul.mubr.f32.gmra.mrb[0].mxu0 %v214
    %v511 = vpop.f32.mrb[0].mxu0
    %v512 = vadd.f32 %v156, %v511
    %v513 = vpop.f32.mrb[0].mxu0
    %514 = vmatprep.mubr.f32.mxu0 0.0
    %515 = vmatmul.mubr.f32.gmra.mrb[0].mxu0 %v217
    %v516 = vpop.f32.mrb[0].mxu0
    %v517 = vadd.f32 %v156, %v516
    %v518 = vpop.f32.mrb[0].mxu0
    %519 = vmatprep.mubr.f32.mxu0 0.0
    %520 = vmatmul.mubr.f32.gmra.mrb[0].mxu0 %v220
    %v521 = vpop.f32.mrb[0].mxu0
    %v522 = vadd.f32 %v156, %v521
    %v523 = vpop.f32.mrb[0].mxu0
    %524 = vmatprep.mubr.f32.mxu0 0.0
    %525 = vmatmul.mubr.f32.gmra.mrb[0].mxu0 %v223
    %v526 = vpop.f32.mrb[0].mxu0
    %v527 = vadd.f32 %v156, %v526
    %v528 = vpop.f32.mrb[0].mxu0
    %529 = vmatprep.mubr.f32.mxu0 0.0
    %530 = vmatmul.mubr.f32.gmra.mrb[0].mxu0 %v226
    %v531 = vpop.f32.mrb[0].mxu0
    %v532 = vadd.f32 %v156, %v531
    %v533 = vpop.f32.mrb[0].mxu0
    %534 = vmatprep.mubr.f32.mxu0 0.0
    %535 = vmatmul.mubr.f32.gmra.mrb[0].mxu0 %v229
    %v536 = vpop.f32.mrb[0].mxu0
    %v537 = vadd.f32 %v156, %v536
    %v538 = vpop.f32.mrb[0].mxu0
    %539 = vmatprep.mubr.f32.mxu0 0.0
    %540 = vmatmul.mubr.f32.gmra.mrb[0].mxu0 %v232
    %v541 = vpop.f32.mrb[0].mxu0
    %v542 = vadd.f32 %v156, %v541
    %v543 = vpop.f32.mrb[0].mxu0
    %544 = vmatprep.mubr.f32.mxu0 0.0
    %545 = vmatmul.mubr.f32.gmra.mrb[0].mxu0 %v235
    %v546 = vpop.f32.mrb[0].mxu0
    %v547 = vadd.f32 %v156, %v546
    %v548 = vpop.f32.mrb[0].mxu0
    %549 = vmatprep.mubr.f32.mxu0 0.0
    %550 = vmatmul.mubr.f32.gmra.mrb[0].mxu0 %v238
    %v551 = vpop.f32.mrb[0].mxu0
    %v552 = vadd.f32 %v156, %v551
    %v553 = vpop.f32.mrb[0].mxu0
    %554 = vmatprep.mubr.f32.mxu0 0.0
    %555 = vmatmul.mubr.f32.gmra.mrb[0].mxu0 %v241
    %v556 = vpop.f32.mrb[0].mxu0
    %v557 = vadd.f32 %v156, %v556
    %v558 = vpop.f32.mrb[0].mxu0
    %559 = vmatprep.mubr.f32.mxu0 0.0
    %560 = vmatmul.mubr.f32.gmra.mrb[0].mxu0 %v244
    %v561 = vpop.f32.mrb[0].mxu0
    %v562 = vadd.f32 %v156, %v561
    %v563 = vpop.f32.mrb[0].mxu0
    %564 = vmatprep.mubr.f32.mxu0 0.0
    %565 = vmatmul.mubr.f32.gmra.mrb[0].mxu0 %v247
    %v566 = vpop.f32.mrb[0].mxu0
    %v567 = vadd.f32 %v156, %v566
    %v568 = vpop.f32.mrb[0].mxu0
    %569 = vmatprep.mubr.f32.mxu0 0.0
    %570 = vmatmul.mubr.f32.gmra.mrb[0].mxu0 %v250
    %v571 = vpop.f32.mrb[0].mxu0
    %v572 = vadd.f32 %v156, %v571
    %v573 = vpop.f32.mrb[0].mxu0
    %574 = vmatprep.mubr.f32.mxu0 0.0
    %575 = vmatmul.mubr.f32.gmra.mrb[0].mxu0 %v253
    %v576 = vpop.f32.mrb[0].mxu0
    %v577 = vadd.f32 %v156, %v576
    %v578 = vpop.f32.mrb[0].mxu0
    %579 = vmatprep.mubr.f32.mxu0 0.0
    %580 = vmatmul.mubr.f32.gmra.mrb[0].mxu0 %v256
    %v581 = vpop.f32.mrb[0].mxu0
    %v582 = vadd.f32 %v156, %v581
    %v583 = vpop.f32.mrb[0].mxu0
    %584 = vmatprep.mubr.f32.mxu0 0.0
    %585 = vmatmul.mubr.f32.gmra.mrb[0].mxu0 %v259
    %v586 = vpop.f32.mrb[0].mxu0
    %v587 = vadd.f32 %v156, %v586
    %v588 = vpop.f32.mrb[0].mxu0
    %589 = vmatprep.mubr.f32.mxu0 0.0
    %590 = vmatmul.mubr.f32.gmra.mrb[0].mxu0 %v262
    %v591 = vpop.f32.mrb[0].mxu0
    %v592 = vadd.f32 %v156, %v591
    %v593 = vpop.f32.mrb[0].mxu0
    %594 = vmatprep.mubr.f32.mxu0 0.0
    %595 = vmatmul.mubr.f32.gmra.mrb[0].mxu0 %v265
    %v596 = vpop.f32.mrb[0].mxu0
    %v597 = vadd.f32 %v156, %v596
    %v598 = vpop.f32.mrb[0].mxu0
    %599 = vmatprep.mubr.f32.mxu0 0.0
    %600 = vmatmul.mubr.f32.gmra.mrb[0].mxu0 %v268
    %v601 = vpop.f32.mrb[0].mxu0
    %v602 = vadd.f32 %v156, %v601
    %v603 = vpop.f32.mrb[0].mxu0
    %604 = vmatprep.mubr.f32.mxu0 0.0
    %605 = vmatmul.mubr.f32.gmra.mrb[0].mxu0 %v271
    %v606 = vpop.f32.mrb[0].mxu0
    %v607 = vadd.f32 %v156, %v606
    %v608 = vpop.f32.mrb[0].mxu0
    %609 = vmatprep.mubr.f32.mxu0 0.0
    %610 = vmatmul.mubr.f32.gmra.mrb[0].mxu0 %v274
    %v611 = vpop.f32.mrb[0].mxu0
    %v612 = vadd.f32 %v156, %v611
    %v613 = vpop.f32.mrb[0].mxu0
    %614 = vmatprep.mubr.f32.mxu0 0.0
    %615 = vmatmul.mubr.f32.gmra.mrb[0].mxu0 %v277
    %v616 = vpop.f32.mrb[0].mxu0
    %v617 = vadd.f32 %v156, %v616
    %v618 = vpop.f32.mrb[0].mxu0
    %619 = vmatprep.mubr.f32.mxu0 0.0
    %620 = vmatmul.mubr.f32.gmra.mrb[0].mxu0 %v280
    %v621 = vpop.f32.mrb[0].mxu0
    %v622 = vadd.f32 %v156, %v621
    %v623 = vpop.f32.mrb[0].mxu0
    %624 = vmatprep.mubr.f32.mxu0 0.0
    %625 = vmatmul.mubr.f32.gmra.mrb[0].mxu0 %v283
    %v626 = vpop.f32.mrb[0].mxu0
    %v627 = vadd.f32 %v156, %v626
    %v628 = vpop.f32.mrb[0].mxu0
    %629 = vmatprep.mubr.f32.mxu0 0.0
    %630 = vmatmul.mubr.f32.gmra.mrb[0].mxu0 %v286
    %v631 = vpop.f32.mrb[0].mxu0
    %v632 = vadd.f32 %v156, %v631
    %v633 = vpop.f32.mrb[0].mxu0
    %634 = vmatprep.mubr.f32.mxu0 0.0
    %635 = vmatmul.mubr.f32.gmra.mrb[0].mxu0 %v289
    %v636 = vpop.f32.mrb[0].mxu0
    %v637 = vadd.f32 %v156, %v636
    %v638 = vpop.f32.mrb[0].mxu0
    %639 = vmatprep.mubr.f32.mxu0 0.0
    %640 = vmatmul.mubr.f32.gmra.mrb[0].mxu0 %v292
    %v641 = vpop.f32.mrb[0].mxu0
    %v642 = vadd.f32 %v156, %v641
    %v643 = vpop.f32.mrb[0].mxu0
    %644 = vmatprep.mubr.f32.mxu0 0.0
    %645 = vmatmul.mubr.f32.gmra.mrb[0].mxu0 %v295
    %v646 = vpop.f32.mrb[0].mxu0
    %v647 = vadd.f32 %v156, %v646
    %v648 = vpop.f32.mrb[0].mxu0
    %649 = vmatprep.mubr.f32.mxu0 0.0
    %650 = vmatmul.mubr.f32.gmra.mrb[0].mxu0 %v298
    %v651 = vpop.f32.mrb[0].mxu0
    %v652 = vadd.f32 %v156, %v651
    %v653 = vpop.f32.mrb[0].mxu0
    %654 = vmatprep.mubr.f32.mxu0 0.0
    %655 = vmatmul.mubr.f32.gmra.mrb[0].mxu0 %v301
    %v656 = vpop.f32.mrb[0].mxu0
    %v657 = vadd.f32 %v156, %v656
    %v658 = vpop.f32.mrb[0].mxu0
    %659 = vmatprep.mubr.f32.mxu0 0.0
    %660 = vmatmul.mubr.f32.gmra.mrb[0].mxu0 %v304
    %v661 = vpop.f32.mrb[0].mxu0
    %v662 = vadd.f32 %v156, %v661
    %v663 = vpop.f32.mrb[0].mxu0
    %664 = vmatprep.mubr.f32.mxu0 0.0
    %665 = vmatmul.mubr.f32.gmra.mrb[0].mxu0 %v307
    %v666 = vpop.f32.mrb[0].mxu0
    %v667 = vadd.f32 %v156, %v666
    %v668 = vpop.f32.mrb[0].mxu0
    %669 = vmatprep.mubr.f32.mxu0 0.0
    %670 = vmatmul.mubr.f32.gmra.mrb[0].mxu0 %v310
    %v671 = vpop.f32.mrb[0].mxu0
    %v672 = vadd.f32 %v156, %v671
    %v673 = vpop.f32.mrb[0].mxu0
    %674 = vmatprep.mubr.f32.mxu0 0.0
    %675 = vmatmul.mubr.f32.gmra.mrb[0].mxu0 %v313
    %v676 = vpop.f32.mrb[0].mxu0
    %v677 = vadd.f32 %v156, %v676
    %v678 = vpop.f32.mrb[0].mxu0
    %679 = vmatprep.mubr.f32.mxu0 0.0
    %680 = vmatmul.mubr.f32.gmra.mrb[0].mxu0 %v316
    %v681 = vpop.f32.mrb[0].mxu0
    %v682 = vadd.f32 %v156, %v681
    %v683 = vpop.f32.mrb[0].mxu0
    %684 = vmatprep.mubr.f32.mxu0 0.0
    %685 = vmatmul.mubr.f32.gmra.mrb[0].mxu0 %v319
    %v686 = vpop.f32.mrb[0].mxu0
    %v687 = vadd.f32 %v156, %v686
    %v688 = vpop.f32.mrb[0].mxu0
    %689 = vmatprep.mubr.f32.mxu0 0.0
    %690 = vmatmul.mubr.f32.gmra.mrb[0].mxu0 %v322
    %v691 = vpop.f32.mrb[0].mxu0
    %v692 = vadd.f32 %v156, %v691
    %v693 = vpop.f32.mrb[0].mxu0
    %694 = vmatprep.mubr.f32.mxu0 0.0
    %695 = vmatmul.mubr.f32.gmra.mrb[0].mxu0 %v325
    %v696 = vpop.f32.mrb[0].mxu0
    %v697 = vadd.f32 %v156, %v696
    %v698 = vpop.f32.mrb[0].mxu0
    %699 = vmatprep.mubr.f32.mxu0 0.0
    %700 = vmatmul.mubr.f32.gmra.mrb[0].mxu0 %v328
    %v701 = vpop.f32.mrb[0].mxu0
    %v702 = vadd.f32 %v156, %v701
    %v703 = vpop.f32.mrb[0].mxu0
    %704 = vmatprep.mubr.f32.mxu0 0.0
    %705 = vmatmul.mubr.f32.gmra.mrb[0].mxu0 %v331
    %v706 = vpop.f32.mrb[0].mxu0
    %v707 = vadd.f32 %v156, %v706
    %v708 = vpop.f32.mrb[0].mxu0
    %709 = vmatprep.mubr.f32.mxu0 0.0
    %710 = vmatmul.mubr.f32.gmra.mrb[0].mxu0 %v334
    %v711 = vpop.f32.mrb[0].mxu0
    %v712 = vadd.f32 %v156, %v711
    %v713 = vpop.f32.mrb[0].mxu0
    %714 = vmatprep.mubr.f32.mxu0 0.0
    %715 = vmatmul.mubr.f32.gmra.mrb[0].mxu0 %v337
    %v716 = vpop.f32.mrb[0].mxu0
    %v717 = vadd.f32 %v156, %v716
    %v718 = vpop.f32.mrb[0].mxu0
    %719 = vmatprep.mubr.f32.mxu0 0.0
    %720 = vmatmul.mubr.f32.gmra.mrb[0].mxu0 %v340
    %v721 = vpop.f32.mrb[0].mxu0
    %v722 = vadd.f32 %v156, %v721
    %v723 = vpop.f32.mrb[0].mxu0
    %724 = vmatprep.mubr.f32.mxu0 0.0
    %725 = vmatmul.mubr.f32.gmra.mrb[0].mxu0 %v343
    %v726 = vpop.f32.mrb[0].mxu0
    %v727 = vadd.f32 %v156, %v726
    %v728 = vpop.f32.mrb[0].mxu0
    %729 = vmatprep.mubr.f32.mxu0 0.0
    %730 = vmatmul.mubr.f32.gmra.mrb[0].mxu0 %v346
    %v731 = vpop.f32.mrb[0].mxu0
    %v732 = vadd.f32 %v156, %v731
    %v733 = vpop.f32.mrb[0].mxu0
    %734 = vmatprep.mubr.f32.mxu0 0.0
    %735 = vmatmul.mubr.f32.gmra.mrb[0].mxu0 %v349
    %v736 = vpop.f32.mrb[0].mxu0
    %v737 = vadd.f32 %v156, %v736
    %v738 = vpop.f32.mrb[0].mxu0
    %739 = vdwg.mxu0
    %vm740 = vcmask 23552
    %v741 = vsel %vm740, %v422, 0.0
    %v742 = vsel %vm740, %v427, 0.0
    %v743 = vadd.f32 %v741, %v742
    %v744 = vsel %vm740, %v432, 0.0
    %v745 = vadd.f32 %v743, %v744
    %v746 = vsel %vm740, %v437, 0.0
    %v747 = vadd.f32 %v745, %v746
    %v748 = vsel %vm740, %v442, 0.0
    %v749 = vadd.f32 %v747, %v748
    %v750 = vsel %vm740, %v447, 0.0
    %v751 = vadd.f32 %v749, %v750
    %v752 = vsel %vm740, %v452, 0.0
    %v753 = vadd.f32 %v751, %v752
    %v754 = vsel %vm740, %v457, 0.0
    %v755 = vadd.f32 %v753, %v754
    %v756 = vsel %vm740, %v462, 0.0
    %v757 = vadd.f32 %v755, %v756
    %v758 = vsel %vm740, %v467, 0.0
    %v759 = vadd.f32 %v757, %v758
    %v760 = vsel %vm740, %v472, 0.0
    %v761 = vadd.f32 %v759, %v760
    %v762 = vsel %vm740, %v477, 0.0
    %v763 = vadd.f32 %v761, %v762
    %v764 = vsel %vm740, %v482, 0.0
    %v765 = vadd.f32 %v763, %v764
    %v766 = vsel %vm740, %v487, 0.0
    %v767 = vadd.f32 %v765, %v766
    %v768 = vsel %vm740, %v492, 0.0
    %v769 = vadd.f32 %v767, %v768
    %v770 = vsel %vm740, %v497, 0.0
    %v771 = vadd.f32 %v769, %v770
    %v772 = vsel %vm740, %v502, 0.0
    %v773 = vadd.f32 %v771, %v772
    %v774 = vsel %vm740, %v507, 0.0
    %v775 = vadd.f32 %v773, %v774
    %v776 = vsel %vm740, %v512, 0.0
    %v777 = vadd.f32 %v775, %v776
    %v778 = vsel %vm740, %v517, 0.0
    %v779 = vadd.f32 %v777, %v778
    %v780 = vsel %vm740, %v522, 0.0
    %v781 = vadd.f32 %v779, %v780
    %v782 = vsel %vm740, %v527, 0.0
    %v783 = vadd.f32 %v781, %v782
    %v784 = vsel %vm740, %v532, 0.0
    %v785 = vadd.f32 %v783, %v784
    %v786 = vsel %vm740, %v537, 0.0
    %v787 = vadd.f32 %v785, %v786
    %v788 = vsel %vm740, %v542, 0.0
    %v789 = vadd.f32 %v787, %v788
    %v790 = vsel %vm740, %v547, 0.0
    %v791 = vadd.f32 %v789, %v790
    %v792 = vsel %vm740, %v552, 0.0
    %v793 = vadd.f32 %v791, %v792
    %v794 = vsel %vm740, %v557, 0.0
    %v795 = vadd.f32 %v793, %v794
    %v796 = vsel %vm740, %v562, 0.0
    %v797 = vadd.f32 %v795, %v796
    %v798 = vsel %vm740, %v567, 0.0
    %v799 = vadd.f32 %v797, %v798
    %v800 = vsel %vm740, %v572, 0.0
    %v801 = vadd.f32 %v799, %v800
    %v802 = vsel %vm740, %v577, 0.0
    %v803 = vadd.f32 %v801, %v802
    %v804 = vsel %vm740, %v582, 0.0
    %v805 = vadd.f32 %v803, %v804
    %v806 = vsel %vm740, %v587, 0.0
    %v807 = vadd.f32 %v805, %v806
    %v808 = vsel %vm740, %v592, 0.0
    %v809 = vadd.f32 %v807, %v808
    %v810 = vsel %vm740, %v597, 0.0
    %v811 = vadd.f32 %v809, %v810
    %v812 = vsel %vm740, %v602, 0.0
    %v813 = vadd.f32 %v811, %v812
    %v814 = vsel %vm740, %v607, 0.0
    %v815 = vadd.f32 %v813, %v814
    %v816 = vsel %vm740, %v612, 0.0
    %v817 = vadd.f32 %v815, %v816
    %v818 = vsel %vm740, %v617, 0.0
    %v819 = vadd.f32 %v817, %v818
    %v820 = vsel %vm740, %v622, 0.0
    %v821 = vadd.f32 %v819, %v820
    %v822 = vsel %vm740, %v627, 0.0
    %v823 = vadd.f32 %v821, %v822
    %v824 = vsel %vm740, %v632, 0.0
    %v825 = vadd.f32 %v823, %v824
    %v826 = vsel %vm740, %v637, 0.0
    %v827 = vadd.f32 %v825, %v826
    %v828 = vsel %vm740, %v642, 0.0
    %v829 = vadd.f32 %v827, %v828
    %v830 = vsel %vm740, %v647, 0.0
    %v831 = vadd.f32 %v829, %v830
    %v832 = vsel %vm740, %v652, 0.0
    %v833 = vadd.f32 %v831, %v832
    %v834 = vsel %vm740, %v657, 0.0
    %v835 = vadd.f32 %v833, %v834
    %v836 = vsel %vm740, %v662, 0.0
    %v837 = vadd.f32 %v835, %v836
    %v838 = vsel %vm740, %v667, 0.0
    %v839 = vadd.f32 %v837, %v838
    %v840 = vsel %vm740, %v672, 0.0
    %v841 = vadd.f32 %v839, %v840
    %v842 = vsel %vm740, %v677, 0.0
    %v843 = vadd.f32 %v841, %v842
    %v844 = vsel %vm740, %v682, 0.0
    %v845 = vadd.f32 %v843, %v844
    %v846 = vsel %vm740, %v687, 0.0
    %v847 = vadd.f32 %v845, %v846
    %v848 = vsel %vm740, %v692, 0.0
    %v849 = vadd.f32 %v847, %v848
    %v850 = vsel %vm740, %v697, 0.0
    %v851 = vadd.f32 %v849, %v850
    %v852 = vsel %vm740, %v702, 0.0
    %v853 = vadd.f32 %v851, %v852
    %v854 = vsel %vm740, %v707, 0.0
    %v855 = vadd.f32 %v853, %v854
    %v856 = vsel %vm740, %v712, 0.0
    %v857 = vadd.f32 %v855, %v856
    %v858 = vsel %vm740, %v717, 0.0
    %v859 = vadd.f32 %v857, %v858
    %v860 = vsel %vm740, %v722, 0.0
    %v861 = vadd.f32 %v859, %v860
    %v862 = vsel %vm740, %v727, 0.0
    %v863 = vadd.f32 %v861, %v862
    %v864 = vsel %vm740, %v732, 0.0
    %v865 = vadd.f32 %v863, %v864
    %v866 = vsel %vm740, %v737, 0.0
    %v867 = vadd.f32 %v865, %v866
    %v868 = vrot.slane %v867, 4
    %v869 = vadd.f32 %v867, %v868
    %v870 = vrot.slane %v869, 2
    %v871 = vadd.f32 %v869, %v870
    %v872 = vrot.slane %v871, 1
    %v873 = vadd.f32 %v871, %v872
    %v874 = vrcp.pop 512.0
    %v875 = vmul.f32 %v873, %v874
    %v876 = vsub.f32 %v422, %v875
    %v877 = vsub.f32 %v427, %v875
    %v878 = vsub.f32 %v432, %v875
    %v879 = vsub.f32 %v437, %v875
    %v880 = vsub.f32 %v442, %v875
    %v881 = vsub.f32 %v447, %v875
    %v882 = vsub.f32 %v452, %v875
    %v883 = vsub.f32 %v457, %v875
    %v884 = vsub.f32 %v462, %v875
    %v885 = vsub.f32 %v467, %v875
    %v886 = vsub.f32 %v472, %v875
    %v887 = vsub.f32 %v477, %v875
    %v888 = vsub.f32 %v482, %v875
    %v889 = vsub.f32 %v487, %v875
    %v890 = vsub.f32 %v492, %v875
    %v891 = vsub.f32 %v497, %v875
    %v892 = vsub.f32 %v502, %v875
    %v893 = vsub.f32 %v507, %v875
    %v894 = vsub.f32 %v512, %v875
    %v895 = vsub.f32 %v517, %v875
    %v896 = vsub.f32 %v522, %v875
    %v897 = vsub.f32 %v527, %v875
    %v898 = vsub.f32 %v532, %v875
    %v899 = vsub.f32 %v537, %v875
    %v900 = vsub.f32 %v542, %v875
    %v901 = vsub.f32 %v547, %v875
    %v902 = vsub.f32 %v552, %v875
    %v903 = vsub.f32 %v557, %v875
    %v904 = vsub.f32 %v562, %v875
    %v905 = vsub.f32 %v567, %v875
    %v906 = vsub.f32 %v572, %v875
    %v907 = vsub.f32 %v577, %v875
    %v908 = vsub.f32 %v582, %v875
    %v909 = vsub.f32 %v587, %v875
    %v910 = vsub.f32 %v592, %v875
    %v911 = vsub.f32 %v597, %v875
    %v912 = vsub.f32 %v602, %v875
    %v913 = vsub.f32 %v607, %v875
    %v914 = vsub.f32 %v612, %v875
    %v915 = vsub.f32 %v617, %v875
    %v916 = vsub.f32 %v622, %v875
    %v917 = vsub.f32 %v627, %v875
    %v918 = vsub.f32 %v632, %v875
    %v919 = vsub.f32 %v637, %v875
    %v920 = vsub.f32 %v642, %v875
    %v921 = vsub.f32 %v647, %v875
    %v922 = vsub.f32 %v652, %v875
    %v923 = vsub.f32 %v657, %v875
    %v924 = vsub.f32 %v662, %v875
    %v925 = vsub.f32 %v667, %v875
    %v926 = vsub.f32 %v672, %v875
    %v927 = vsub.f32 %v677, %v875
    %v928 = vsub.f32 %v682, %v875
    %v929 = vsub.f32 %v687, %v875
    %v930 = vsub.f32 %v692, %v875
    %v931 = vsub.f32 %v697, %v875
    %v932 = vsub.f32 %v702, %v875
    %v933 = vsub.f32 %v707, %v875
    %v934 = vsub.f32 %v712, %v875
    %v935 = vsub.f32 %v717, %v875
    %v936 = vsub.f32 %v722, %v875
    %v937 = vsub.f32 %v727, %v875
    %v938 = vsub.f32 %v732, %v875
    %v939 = vsub.f32 %v737, %v875
    %v940 = vmul.f32 %v876, %v876
    %v941 = vmul.f32 %v877, %v877
    %v942 = vmul.f32 %v878, %v878
    %v943 = vmul.f32 %v879, %v879
    %v944 = vmul.f32 %v880, %v880
    %v945 = vmul.f32 %v881, %v881
    %v946 = vmul.f32 %v882, %v882
    %v947 = vmul.f32 %v883, %v883
    %v948 = vmul.f32 %v884, %v884
    %v949 = vmul.f32 %v885, %v885
    %v950 = vmul.f32 %v886, %v886
    %v951 = vmul.f32 %v887, %v887
    %v952 = vmul.f32 %v888, %v888
    %v953 = vmul.f32 %v889, %v889
    %v954 = vmul.f32 %v890, %v890
    %v955 = vmul.f32 %v891, %v891
    %v956 = vmul.f32 %v892, %v892
    %v957 = vmul.f32 %v893, %v893
    %v958 = vmul.f32 %v894, %v894
    %v959 = vmul.f32 %v895, %v895
    %v960 = vmul.f32 %v896, %v896
    %v961 = vmul.f32 %v897, %v897
    %v962 = vmul.f32 %v898, %v898
    %v963 = vmul.f32 %v899, %v899
    %v964 = vmul.f32 %v900, %v900
    %v965 = vmul.f32 %v901, %v901
    %v966 = vmul.f32 %v902, %v902
    %v967 = vmul.f32 %v903, %v903
    %v968 = vmul.f32 %v904, %v904
    %v969 = vmul.f32 %v905, %v905
    %v970 = vmul.f32 %v906, %v906
    %v971 = vmul.f32 %v907, %v907
    %v972 = vmul.f32 %v908, %v908
    %v973 = vmul.f32 %v909, %v909
    %v974 = vmul.f32 %v910, %v910
    %v975 = vmul.f32 %v911, %v911
    %v976 = vmul.f32 %v912, %v912
    %v977 = vmul.f32 %v913, %v913
    %v978 = vmul.f32 %v914, %v914
    %v979 = vmul.f32 %v915, %v915
    %v980 = vmul.f32 %v916, %v916
    %v981 = vmul.f32 %v917, %v917
    %v982 = vmul.f32 %v918, %v918
    %v983 = vmul.f32 %v919, %v919
    %v984 = vmul.f32 %v920, %v920
    %v985 = vmul.f32 %v921, %v921
    %v986 = vmul.f32 %v922, %v922
    %v987 = vmul.f32 %v923, %v923
    %v988 = vmul.f32 %v924, %v924
    %v989 = vmul.f32 %v925, %v925
    %v990 = vmul.f32 %v926, %v926
    %v991 = vmul.f32 %v927, %v927
    %v992 = vmul.f32 %v928, %v928
    %v993 = vmul.f32 %v929, %v929
    %v994 = vmul.f32 %v930, %v930
    %v995 = vmul.f32 %v931, %v931
    %v996 = vmul.f32 %v932, %v932
    %v997 = vmul.f32 %v933, %v933
    %v998 = vmul.f32 %v934, %v934
    %v999 = vmul.f32 %v935, %v935
    %v1000 = vmul.f32 %v936, %v936
    %v1001 = vmul.f32 %v937, %v937
    %v1002 = vmul.f32 %v938, %v938
    %v1003 = vmul.f32 %v939, %v939
    %v1004 = vsel %vm740, %v940, 0.0
    %v1005 = vsel %vm740, %v941, 0.0
    %v1006 = vadd.f32 %v1004, %v1005
    %v1007 = vsel %vm740, %v942, 0.0
    %v1008 = vadd.f32 %v1006, %v1007
    %v1009 = vsel %vm740, %v943, 0.0
    %v1010 = vadd.f32 %v1008, %v1009
    %v1011 = vsel %vm740, %v944, 0.0
    %v1012 = vadd.f32 %v1010, %v1011
    %v1013 = vsel %vm740, %v945, 0.0
    %v1014 = vadd.f32 %v1012, %v1013
    %v1015 = vsel %vm740, %v946, 0.0
    %v1016 = vadd.f32 %v1014, %v1015
    %v1017 = vsel %vm740, %v947, 0.0
    %v1018 = vadd.f32 %v1016, %v1017
    %v1019 = vsel %vm740, %v948, 0.0
    %v1020 = vadd.f32 %v1018, %v1019
    %v1021 = vsel %vm740, %v949, 0.0
    %v1022 = vadd.f32 %v1020, %v1021
    %v1023 = vsel %vm740, %v950, 0.0
    %v1024 = vadd.f32 %v1022, %v1023
    %v1025 = vsel %vm740, %v951, 0.0
    %v1026 = vadd.f32 %v1024, %v1025
    %v1027 = vsel %vm740, %v952, 0.0
    %v1028 = vadd.f32 %v1026, %v1027
    %v1029 = vsel %vm740, %v953, 0.0
    %v1030 = vadd.f32 %v1028, %v1029
    %v1031 = vsel %vm740, %v954, 0.0
    %v1032 = vadd.f32 %v1030, %v1031
    %v1033 = vsel %vm740, %v955, 0.0
    %v1034 = vadd.f32 %v1032, %v1033
    %v1035 = vsel %vm740, %v956, 0.0
    %v1036 = vadd.f32 %v1034, %v1035
    %v1037 = vsel %vm740, %v957, 0.0
    %v1038 = vadd.f32 %v1036, %v1037
    %v1039 = vsel %vm740, %v958, 0.0
    %v1040 = vadd.f32 %v1038, %v1039
    %v1041 = vsel %vm740, %v959, 0.0
    %v1042 = vadd.f32 %v1040, %v1041
    %v1043 = vsel %vm740, %v960, 0.0
    %v1044 = vadd.f32 %v1042, %v1043
    %v1045 = vsel %vm740, %v961, 0.0
    %v1046 = vadd.f32 %v1044, %v1045
    %v1047 = vsel %vm740, %v962, 0.0
    %v1048 = vadd.f32 %v1046, %v1047
    %v1049 = vsel %vm740, %v963, 0.0
    %v1050 = vadd.f32 %v1048, %v1049
    %v1051 = vsel %vm740, %v964, 0.0
    %v1052 = vadd.f32 %v1050, %v1051
    %v1053 = vsel %vm740, %v965, 0.0
    %v1054 = vadd.f32 %v1052, %v1053
    %v1055 = vsel %vm740, %v966, 0.0
    %v1056 = vadd.f32 %v1054, %v1055
    %v1057 = vsel %vm740, %v967, 0.0
    %v1058 = vadd.f32 %v1056, %v1057
    %v1059 = vsel %vm740, %v968, 0.0
    %v1060 = vadd.f32 %v1058, %v1059
    %v1061 = vsel %vm740, %v969, 0.0
    %v1062 = vadd.f32 %v1060, %v1061
    %v1063 = vsel %vm740, %v970, 0.0
    %v1064 = vadd.f32 %v1062, %v1063
    %v1065 = vsel %vm740, %v971, 0.0
    %v1066 = vadd.f32 %v1064, %v1065
    %v1067 = vsel %vm740, %v972, 0.0
    %v1068 = vadd.f32 %v1066, %v1067
    %v1069 = vsel %vm740, %v973, 0.0
    %v1070 = vadd.f32 %v1068, %v1069
    %v1071 = vsel %vm740, %v974, 0.0
    %v1072 = vadd.f32 %v1070, %v1071
    %v1073 = vsel %vm740, %v975, 0.0
    %v1074 = vadd.f32 %v1072, %v1073
    %v1075 = vsel %vm740, %v976, 0.0
    %v1076 = vadd.f32 %v1074, %v1075
    %v1077 = vsel %vm740, %v977, 0.0
    %v1078 = vadd.f32 %v1076, %v1077
    %v1079 = vsel %vm740, %v978, 0.0
    %v1080 = vadd.f32 %v1078, %v1079
    %v1081 = vsel %vm740, %v979, 0.0
    %v1082 = vadd.f32 %v1080, %v1081
    %v1083 = vsel %vm740, %v980, 0.0
    %v1084 = vadd.f32 %v1082, %v1083
    %v1085 = vsel %vm740, %v981, 0.0
    %v1086 = vadd.f32 %v1084, %v1085
    %v1087 = vsel %vm740, %v982, 0.0
    %v1088 = vadd.f32 %v1086, %v1087
    %v1089 = vsel %vm740, %v983, 0.0
    %v1090 = vadd.f32 %v1088, %v1089
    %v1091 = vsel %vm740, %v984, 0.0
    %v1092 = vadd.f32 %v1090, %v1091
    %v1093 = vsel %vm740, %v985, 0.0
    %v1094 = vadd.f32 %v1092, %v1093
    %v1095 = vsel %vm740, %v986, 0.0
    %v1096 = vadd.f32 %v1094, %v1095
    %v1097 = vsel %vm740, %v987, 0.0
    %v1098 = vadd.f32 %v1096, %v1097
    %v1099 = vsel %vm740, %v988, 0.0
    %v1100 = vadd.f32 %v1098, %v1099
    %v1101 = vsel %vm740, %v989, 0.0
    %v1102 = vadd.f32 %v1100, %v1101
    %v1103 = vsel %vm740, %v990, 0.0
    %v1104 = vadd.f32 %v1102, %v1103
    %v1105 = vsel %vm740, %v991, 0.0
    %v1106 = vadd.f32 %v1104, %v1105
    %v1107 = vsel %vm740, %v992, 0.0
    %v1108 = vadd.f32 %v1106, %v1107
    %v1109 = vsel %vm740, %v993, 0.0
    %v1110 = vadd.f32 %v1108, %v1109
    %v1111 = vsel %vm740, %v994, 0.0
    %v1112 = vadd.f32 %v1110, %v1111
    %v1113 = vsel %vm740, %v995, 0.0
    %v1114 = vadd.f32 %v1112, %v1113
    %v1115 = vsel %vm740, %v996, 0.0
    %v1116 = vadd.f32 %v1114, %v1115
    %v1117 = vsel %vm740, %v997, 0.0
    %v1118 = vadd.f32 %v1116, %v1117
    %v1119 = vsel %vm740, %v998, 0.0
    %v1120 = vadd.f32 %v1118, %v1119
    %v1121 = vsel %vm740, %v999, 0.0
    %v1122 = vadd.f32 %v1120, %v1121
    %v1123 = vsel %vm740, %v1000, 0.0
    %v1124 = vadd.f32 %v1122, %v1123
    %v1125 = vsel %vm740, %v1001, 0.0
    %v1126 = vadd.f32 %v1124, %v1125
    %v1127 = vsel %vm740, %v1002, 0.0
    %v1128 = vadd.f32 %v1126, %v1127
    %v1129 = vsel %vm740, %v1003, 0.0
    %v1130 = vadd.f32 %v1128, %v1129
    %v1131 = vrot.slane %v1130, 4
    %v1132 = vadd.f32 %v1130, %v1131
    %v1133 = vrot.slane %v1132, 2
    %v1134 = vadd.f32 %v1132, %v1133
    %v1135 = vrot.slane %v1134, 1
    %v1136 = vadd.f32 %v1134, %v1135
    %v1137 = vmul.f32 %v1136, %v874
    %v1138 = vadd.f32 %v1137, 1e-05
    %v1139 = vrsqrt.pop %v1138
    %v1140 = vmul.f32 %v876, %v1139
    %v1141 = vmul.f32 %v877, %v1139
    %v1142 = vmul.f32 %v878, %v1139
    %v1143 = vmul.f32 %v879, %v1139
    %v1144 = vmul.f32 %v880, %v1139
    %v1145 = vmul.f32 %v881, %v1139
    %v1146 = vmul.f32 %v882, %v1139
    %v1147 = vmul.f32 %v883, %v1139
    %v1148 = vmul.f32 %v884, %v1139
    %v1149 = vmul.f32 %v885, %v1139
    %v1150 = vmul.f32 %v886, %v1139
    %v1151 = vmul.f32 %v887, %v1139
    %v1152 = vmul.f32 %v888, %v1139
    %v1153 = vmul.f32 %v889, %v1139
    %v1154 = vmul.f32 %v890, %v1139
    %v1155 = vmul.f32 %v891, %v1139
    %v1156 = vmul.f32 %v892, %v1139
    %v1157 = vmul.f32 %v893, %v1139
    %v1158 = vmul.f32 %v894, %v1139
    %v1159 = vmul.f32 %v895, %v1139
    %v1160 = vmul.f32 %v896, %v1139
    %v1161 = vmul.f32 %v897, %v1139
    %v1162 = vmul.f32 %v898, %v1139
    %v1163 = vmul.f32 %v899, %v1139
    %v1164 = vmul.f32 %v900, %v1139
    %v1165 = vmul.f32 %v901, %v1139
    %v1166 = vmul.f32 %v902, %v1139
    %v1167 = vmul.f32 %v903, %v1139
    %v1168 = vmul.f32 %v904, %v1139
    %v1169 = vmul.f32 %v905, %v1139
    %v1170 = vmul.f32 %v906, %v1139
    %v1171 = vmul.f32 %v907, %v1139
    %v1172 = vmul.f32 %v908, %v1139
    %v1173 = vmul.f32 %v909, %v1139
    %v1174 = vmul.f32 %v910, %v1139
    %v1175 = vmul.f32 %v911, %v1139
    %v1176 = vmul.f32 %v912, %v1139
    %v1177 = vmul.f32 %v913, %v1139
    %v1178 = vmul.f32 %v914, %v1139
    %v1179 = vmul.f32 %v915, %v1139
    %v1180 = vmul.f32 %v916, %v1139
    %v1181 = vmul.f32 %v917, %v1139
    %v1182 = vmul.f32 %v918, %v1139
    %v1183 = vmul.f32 %v919, %v1139
    %v1184 = vmul.f32 %v920, %v1139
    %v1185 = vmul.f32 %v921, %v1139
    %v1186 = vmul.f32 %v922, %v1139
    %v1187 = vmul.f32 %v923, %v1139
    %v1188 = vmul.f32 %v924, %v1139
    %v1189 = vmul.f32 %v925, %v1139
    %v1190 = vmul.f32 %v926, %v1139
    %v1191 = vmul.f32 %v927, %v1139
    %v1192 = vmul.f32 %v928, %v1139
    %v1193 = vmul.f32 %v929, %v1139
    %v1194 = vmul.f32 %v930, %v1139
    %v1195 = vmul.f32 %v931, %v1139
    %v1196 = vmul.f32 %v932, %v1139
    %v1197 = vmul.f32 %v933, %v1139
    %v1198 = vmul.f32 %v934, %v1139
    %v1199 = vmul.f32 %v935, %v1139
    %v1200 = vmul.f32 %v936, %v1139
    %v1201 = vmul.f32 %v937, %v1139
    %v1202 = vmul.f32 %v938, %v1139
    %v1203 = vmul.f32 %v939, %v1139
    %v1204 = vld [vmem:[#allocation9] sm:$0x1]
    %v1206 = vlaneseq
    %v1207 = vshrl.u32 %v1206, 7
    %v1208 = vsub.s32 0, %v1207
    %v1209 = vrot.slane %v1204, %v1208
    %v1211 = vmul.f32 %v1140, %v1209
    %v1212 = vmul.f32 %v1141, %v1209
    %v1213 = vmul.f32 %v1142, %v1209
    %v1214 = vmul.f32 %v1143, %v1209
    %v1215 = vmul.f32 %v1144, %v1209
    %v1216 = vmul.f32 %v1145, %v1209
    %v1217 = vmul.f32 %v1146, %v1209
    %v1218 = vmul.f32 %v1147, %v1209
    %v1219 = vmul.f32 %v1148, %v1209
    %v1220 = vmul.f32 %v1149, %v1209
    %v1221 = vmul.f32 %v1150, %v1209
    %v1222 = vmul.f32 %v1151, %v1209
    %v1223 = vmul.f32 %v1152, %v1209
    %v1224 = vmul.f32 %v1153, %v1209
    %v1225 = vmul.f32 %v1154, %v1209
    %v1226 = vmul.f32 %v1155, %v1209
    %v1227 = vmul.f32 %v1156, %v1209
    %v1228 = vmul.f32 %v1157, %v1209
    %v1229 = vmul.f32 %v1158, %v1209
    %v1230 = vmul.f32 %v1159, %v1209
    %v1231 = vmul.f32 %v1160, %v1209
    %v1232 = vmul.f32 %v1161, %v1209
    %v1233 = vmul.f32 %v1162, %v1209
    %v1234 = vmul.f32 %v1163, %v1209
    %v1235 = vmul.f32 %v1164, %v1209
    %v1236 = vmul.f32 %v1165, %v1209
    %v1237 = vmul.f32 %v1166, %v1209
    %v1238 = vmul.f32 %v1167, %v1209
    %v1239 = vmul.f32 %v1168, %v1209
    %v1240 = vmul.f32 %v1169, %v1209
    %v1241 = vmul.f32 %v1170, %v1209
    %v1242 = vmul.f32 %v1171, %v1209
    %v1243 = vmul.f32 %v1172, %v1209
    %v1244 = vmul.f32 %v1173, %v1209
    %v1245 = vmul.f32 %v1174, %v1209
    %v1246 = vmul.f32 %v1175, %v1209
    %v1247 = vmul.f32 %v1176, %v1209
    %v1248 = vmul.f32 %v1177, %v1209
    %v1249 = vmul.f32 %v1178, %v1209
    %v1250 = vmul.f32 %v1179, %v1209
    %v1251 = vmul.f32 %v1180, %v1209
    %v1252 = vmul.f32 %v1181, %v1209
    %v1253 = vmul.f32 %v1182, %v1209
    %v1254 = vmul.f32 %v1183, %v1209
    %v1255 = vmul.f32 %v1184, %v1209
    %v1256 = vmul.f32 %v1185, %v1209
    %v1257 = vmul.f32 %v1186, %v1209
    %v1258 = vmul.f32 %v1187, %v1209
    %v1259 = vmul.f32 %v1188, %v1209
    %v1260 = vmul.f32 %v1189, %v1209
    %v1261 = vmul.f32 %v1190, %v1209
    %v1262 = vmul.f32 %v1191, %v1209
    %v1263 = vmul.f32 %v1192, %v1209
    %v1264 = vmul.f32 %v1193, %v1209
    %v1265 = vmul.f32 %v1194, %v1209
    %v1266 = vmul.f32 %v1195, %v1209
    %v1267 = vmul.f32 %v1196, %v1209
    %v1268 = vmul.f32 %v1197, %v1209
    %v1269 = vmul.f32 %v1198, %v1209
    %v1270 = vmul.f32 %v1199, %v1209
    %v1271 = vmul.f32 %v1200, %v1209
    %v1272 = vmul.f32 %v1201, %v1209
    %v1273 = vmul.f32 %v1202, %v1209
    %v1274 = vmul.f32 %v1203, %v1209
    %v1275 = vld [vmem:[#allocation11] sm:$0x1]
    %v1277 = vlaneseq
    %v1278 = vshrl.u32 %v1277, 7
    %v1279 = vsub.s32 0, %v1278
    %v1280 = vrot.slane %v1275, %v1279
    %v1282 = vadd.f32 %v1211, %v1280
    %v1283 = vadd.f32 %v1212, %v1280
    %v1284 = vadd.f32 %v1213, %v1280
    %v1285 = vadd.f32 %v1214, %v1280
    %v1286 = vadd.f32 %v1215, %v1280
    %v1287 = vadd.f32 %v1216, %v1280
    %v1288 = vadd.f32 %v1217, %v1280
    %v1289 = vadd.f32 %v1218, %v1280
    %v1290 = vadd.f32 %v1219, %v1280
    %v1291 = vadd.f32 %v1220, %v1280
    %v1292 = vadd.f32 %v1221, %v1280
    %v1293 = vadd.f32 %v1222, %v1280
    %v1294 = vadd.f32 %v1223, %v1280
    %v1295 = vadd.f32 %v1224, %v1280
    %v1296 = vadd.f32 %v1225, %v1280
    %v1297 = vadd.f32 %v1226, %v1280
    %v1298 = vadd.f32 %v1227, %v1280
    %v1299 = vadd.f32 %v1228, %v1280
    %v1300 = vadd.f32 %v1229, %v1280
    %v1301 = vadd.f32 %v1230, %v1280
    %v1302 = vadd.f32 %v1231, %v1280
    %v1303 = vadd.f32 %v1232, %v1280
    %v1304 = vadd.f32 %v1233, %v1280
    %v1305 = vadd.f32 %v1234, %v1280
    %v1306 = vadd.f32 %v1235, %v1280
    %v1307 = vadd.f32 %v1236, %v1280
    %v1308 = vadd.f32 %v1237, %v1280
    %v1309 = vadd.f32 %v1238, %v1280
    %v1310 = vadd.f32 %v1239, %v1280
    %v1311 = vadd.f32 %v1240, %v1280
    %v1312 = vadd.f32 %v1241, %v1280
    %v1313 = vadd.f32 %v1242, %v1280
    %v1314 = vadd.f32 %v1243, %v1280
    %v1315 = vadd.f32 %v1244, %v1280
    %v1316 = vadd.f32 %v1245, %v1280
    %v1317 = vadd.f32 %v1246, %v1280
    %v1318 = vadd.f32 %v1247, %v1280
    %v1319 = vadd.f32 %v1248, %v1280
    %v1320 = vadd.f32 %v1249, %v1280
    %v1321 = vadd.f32 %v1250, %v1280
    %v1322 = vadd.f32 %v1251, %v1280
    %v1323 = vadd.f32 %v1252, %v1280
    %v1324 = vadd.f32 %v1253, %v1280
    %v1325 = vadd.f32 %v1254, %v1280
    %v1326 = vadd.f32 %v1255, %v1280
    %v1327 = vadd.f32 %v1256, %v1280
    %v1328 = vadd.f32 %v1257, %v1280
    %v1329 = vadd.f32 %v1258, %v1280
    %v1330 = vadd.f32 %v1259, %v1280
    %v1331 = vadd.f32 %v1260, %v1280
    %v1332 = vadd.f32 %v1261, %v1280
    %v1333 = vadd.f32 %v1262, %v1280
    %v1334 = vadd.f32 %v1263, %v1280
    %v1335 = vadd.f32 %v1264, %v1280
    %v1336 = vadd.f32 %v1265, %v1280
    %v1337 = vadd.f32 %v1266, %v1280
    %v1338 = vadd.f32 %v1267, %v1280
    %v1339 = vadd.f32 %v1268, %v1280
    %v1340 = vadd.f32 %v1269, %v1280
    %v1341 = vadd.f32 %v1270, %v1280
    %v1342 = vadd.f32 %v1271, %v1280
    %v1343 = vadd.f32 %v1272, %v1280
    %v1344 = vadd.f32 %v1273, %v1280
    %v1345 = vadd.f32 %v1274, %v1280
    %vm1346 = vcmp.ge.f32.partialorder %v1282, 0.0
    %vm1347 = vcmp.ge.f32.partialorder %v1283, 0.0
    %vm1348 = vcmp.ge.f32.partialorder %v1284, 0.0
    %vm1349 = vcmp.ge.f32.partialorder %v1285, 0.0
    %vm1350 = vcmp.ge.f32.partialorder %v1286, 0.0
    %vm1351 = vcmp.ge.f32.partialorder %v1287, 0.0
    %vm1352 = vcmp.ge.f32.partialorder %v1288, 0.0
    %vm1353 = vcmp.ge.f32.partialorder %v1289, 0.0
    %vm1354 = vcmp.ge.f32.partialorder %v1290, 0.0
    %vm1355 = vcmp.ge.f32.partialorder %v1291, 0.0
    %vm1356 = vcmp.ge.f32.partialorder %v1292, 0.0
    %vm1357 = vcmp.ge.f32.partialorder %v1293, 0.0
    %vm1358 = vcmp.ge.f32.partialorder %v1294, 0.0
    %vm1359 = vcmp.ge.f32.partialorder %v1295, 0.0
    %vm1360 = vcmp.ge.f32.partialorder %v1296, 0.0
    %vm1361 = vcmp.ge.f32.partialorder %v1297, 0.0
    %vm1362 = vcmp.ge.f32.partialorder %v1298, 0.0
    %vm1363 = vcmp.ge.f32.partialorder %v1299, 0.0
    %vm1364 = vcmp.ge.f32.partialorder %v1300, 0.0
    %vm1365 = vcmp.ge.f32.partialorder %v1301, 0.0
    %vm1366 = vcmp.ge.f32.partialorder %v1302, 0.0
    %vm1367 = vcmp.ge.f32.partialorder %v1303, 0.0
    %vm1368 = vcmp.ge.f32.partialorder %v1304, 0.0
    %vm1369 = vcmp.ge.f32.partialorder %v1305, 0.0
    %vm1370 = vcmp.ge.f32.partialorder %v1306, 0.0
    %vm1371 = vcmp.ge.f32.partialorder %v1307, 0.0
    %vm1372 = vcmp.ge.f32.partialorder %v1308, 0.0
    %vm1373 = vcmp.ge.f32.partialorder %v1309, 0.0
    %vm1374 = vcmp.ge.f32.partialorder %v1310, 0.0
    %vm1375 = vcmp.ge.f32.partialorder %v1311, 0.0
    %vm1376 = vcmp.ge.f32.partialorder %v1312, 0.0
    %vm1377 = vcmp.ge.f32.partialorder %v1313, 0.0
    %vm1378 = vcmp.ge.f32.partialorder %v1314, 0.0
    %vm1379 = vcmp.ge.f32.partialorder %v1315, 0.0
    %vm1380 = vcmp.ge.f32.partialorder %v1316, 0.0
    %vm1381 = vcmp.ge.f32.partialorder %v1317, 0.0
    %vm1382 = vcmp.ge.f32.partialorder %v1318, 0.0
    %vm1383 = vcmp.ge.f32.partialorder %v1319, 0.0
    %vm1384 = vcmp.ge.f32.partialorder %v1320, 0.0
    %vm1385 = vcmp.ge.f32.partialorder %v1321, 0.0
    %vm1386 = vcmp.ge.f32.partialorder %v1322, 0.0
    %vm1387 = vcmp.ge.f32.partialorder %v1323, 0.0
    %vm1388 = vcmp.ge.f32.partialorder %v1324, 0.0
    %vm1389 = vcmp.ge.f32.partialorder %v1325, 0.0
    %vm1390 = vcmp.ge.f32.partialorder %v1326, 0.0
    %vm1391 = vcmp.ge.f32.partialorder %v1327, 0.0
    %vm1392 = vcmp.ge.f32.partialorder %v1328, 0.0
    %vm1393 = vcmp.ge.f32.partialorder %v1329, 0.0
    %vm1394 = vcmp.ge.f32.partialorder %v1330, 0.0
    %vm1395 = vcmp.ge.f32.partialorder %v1331, 0.0
    %vm1396 = vcmp.ge.f32.partialorder %v1332, 0.0
    %vm1397 = vcmp.ge.f32.partialorder %v1333, 0.0
    %vm1398 = vcmp.ge.f32.partialorder %v1334, 0.0
    %vm1399 = vcmp.ge.f32.partialorder %v1335, 0.0
    %vm1400 = vcmp.ge.f32.partialorder %v1336, 0.0
    %vm1401 = vcmp.ge.f32.partialorder %v1337, 0.0
    %vm1402 = vcmp.ge.f32.partialorder %v1338, 0.0
    %vm1403 = vcmp.ge.f32.partialorder %v1339, 0.0
    %vm1404 = vcmp.ge.f32.partialorder %v1340, 0.0
    %vm1405 = vcmp.ge.f32.partialorder %v1341, 0.0
    %vm1406 = vcmp.ge.f32.partialorder %v1342, 0.0
    %vm1407 = vcmp.ge.f32.partialorder %v1343, 0.0
    %vm1408 = vcmp.ge.f32.partialorder %v1344, 0.0
    %vm1409 = vcmp.ge.f32.partialorder %v1345, 0.0
    %v1410 = vmul.f32 %v1282, 0.01
    %v1411 = vmul.f32 %v1283, 0.01
    %v1412 = vmul.f32 %v1284, 0.01
    %v1413 = vmul.f32 %v1285, 0.01
    %v1414 = vmul.f32 %v1286, 0.01
    %v1415 = vmul.f32 %v1287, 0.01
    %v1416 = vmul.f32 %v1288, 0.01
    %v1417 = vmul.f32 %v1289, 0.01
    %v1418 = vmul.f32 %v1290, 0.01
    %v1419 = vmul.f32 %v1291, 0.01
    %v1420 = vmul.f32 %v1292, 0.01
    %v1421 = vmul.f32 %v1293, 0.01
    %v1422 = vmul.f32 %v1294, 0.01
    %v1423 = vmul.f32 %v1295, 0.01
    %v1424 = vmul.f32 %v1296, 0.01
    %v1425 = vmul.f32 %v1297, 0.01
    %v1426 = vmul.f32 %v1298, 0.01
    %v1427 = vmul.f32 %v1299, 0.01
    %v1428 = vmul.f32 %v1300, 0.01
    %v1429 = vmul.f32 %v1301, 0.01
    %v1430 = vmul.f32 %v1302, 0.01
    %v1431 = vmul.f32 %v1303, 0.01
    %v1432 = vmul.f32 %v1304, 0.01
    %v1433 = vmul.f32 %v1305, 0.01
    %v1434 = vmul.f32 %v1306, 0.01
    %v1435 = vmul.f32 %v1307, 0.01
    %v1436 = vmul.f32 %v1308, 0.01
    %v1437 = vmul.f32 %v1309, 0.01
    %v1438 = vmul.f32 %v1310, 0.01
    %v1439 = vmul.f32 %v1311, 0.01
    %v1440 = vmul.f32 %v1312, 0.01
    %v1441 = vmul.f32 %v1313, 0.01
    %v1442 = vmul.f32 %v1314, 0.01
    %v1443 = vmul.f32 %v1315, 0.01
    %v1444 = vmul.f32 %v1316, 0.01
    %v1445 = vmul.f32 %v1317, 0.01
    %v1446 = vmul.f32 %v1318, 0.01
    %v1447 = vmul.f32 %v1319, 0.01
    %v1448 = vmul.f32 %v1320, 0.01
    %v1449 = vmul.f32 %v1321, 0.01
    %v1450 = vmul.f32 %v1322, 0.01
    %v1451 = vmul.f32 %v1323, 0.01
    %v1452 = vmul.f32 %v1324, 0.01
    %v1453 = vmul.f32 %v1325, 0.01
    %v1454 = vmul.f32 %v1326, 0.01
    %v1455 = vmul.f32 %v1327, 0.01
    %v1456 = vmul.f32 %v1328, 0.01
    %v1457 = vmul.f32 %v1329, 0.01
    %v1458 = vmul.f32 %v1330, 0.01
    %v1459 = vmul.f32 %v1331, 0.01
    %v1460 = vmul.f32 %v1332, 0.01
    %v1461 = vmul.f32 %v1333, 0.01
    %v1462 = vmul.f32 %v1334, 0.01
    %v1463 = vmul.f32 %v1335, 0.01
    %v1464 = vmul.f32 %v1336, 0.01
    %v1465 = vmul.f32 %v1337, 0.01
    %v1466 = vmul.f32 %v1338, 0.01
    %v1467 = vmul.f32 %v1339, 0.01
    %v1468 = vmul.f32 %v1340, 0.01
    %v1469 = vmul.f32 %v1341, 0.01
    %v1470 = vmul.f32 %v1342, 0.01
    %v1471 = vmul.f32 %v1343, 0.01
    %v1472 = vmul.f32 %v1344, 0.01
    %v1473 = vmul.f32 %v1345, 0.01
    %v1474 = vsel %vm1346, %v1282, %v1410
    %v1475 = vsel %vm1347, %v1283, %v1411
    %v1476 = vsel %vm1348, %v1284, %v1412
    %v1477 = vsel %vm1349, %v1285, %v1413
    %v1478 = vsel %vm1350, %v1286, %v1414
    %v1479 = vsel %vm1351, %v1287, %v1415
    %v1480 = vsel %vm1352, %v1288, %v1416
    %v1481 = vsel %vm1353, %v1289, %v1417
    %v1482 = vsel %vm1354, %v1290, %v1418
    %v1483 = vsel %vm1355, %v1291, %v1419
    %v1484 = vsel %vm1356, %v1292, %v1420
    %v1485 = vsel %vm1357, %v1293, %v1421
    %v1486 = vsel %vm1358, %v1294, %v1422
    %v1487 = vsel %vm1359, %v1295, %v1423
    %v1488 = vsel %vm1360, %v1296, %v1424
    %v1489 = vsel %vm1361, %v1297, %v1425
    %v1490 = vsel %vm1362, %v1298, %v1426
    %v1491 = vsel %vm1363, %v1299, %v1427
    %v1492 = vsel %vm1364, %v1300, %v1428
    %v1493 = vsel %vm1365, %v1301, %v1429
    %v1494 = vsel %vm1366, %v1302, %v1430
    %v1495 = vsel %vm1367, %v1303, %v1431
    %v1496 = vsel %vm1368, %v1304, %v1432
    %v1497 = vsel %vm1369, %v1305, %v1433
    %v1498 = vsel %vm1370, %v1306, %v1434
    %v1499 = vsel %vm1371, %v1307, %v1435
    %v1500 = vsel %vm1372, %v1308, %v1436
    %v1501 = vsel %vm1373, %v1309, %v1437
    %v1502 = vsel %vm1374, %v1310, %v1438
    %v1503 = vsel %vm1375, %v1311, %v1439
    %v1504 = vsel %vm1376, %v1312, %v1440
    %v1505 = vsel %vm1377, %v1313, %v1441
    %v1506 = vsel %vm1378, %v1314, %v1442
    %v1507 = vsel %vm1379, %v1315, %v1443
    %v1508 = vsel %vm1380, %v1316, %v1444
    %v1509 = vsel %vm1381, %v1317, %v1445
    %v1510 = vsel %vm1382, %v1318, %v1446
    %v1511 = vsel %vm1383, %v1319, %v1447
    %v1512 = vsel %vm1384, %v1320, %v1448
    %v1513 = vsel %vm1385, %v1321, %v1449
    %v1514 = vsel %vm1386, %v1322, %v1450
    %v1515 = vsel %vm1387, %v1323, %v1451
    %v1516 = vsel %vm1388, %v1324, %v1452
    %v1517 = vsel %vm1389, %v1325, %v1453
    %v1518 = vsel %vm1390, %v1326, %v1454
    %v1519 = vsel %vm1391, %v1327, %v1455
    %v1520 = vsel %vm1392, %v1328, %v1456
    %v1521 = vsel %vm1393, %v1329, %v1457
    %v1522 = vsel %vm1394, %v1330, %v1458
    %v1523 = vsel %vm1395, %v1331, %v1459
    %v1524 = vsel %vm1396, %v1332, %v1460
    %v1525 = vsel %vm1397, %v1333, %v1461
    %v1526 = vsel %vm1398, %v1334, %v1462
    %v1527 = vsel %vm1399, %v1335, %v1463
    %v1528 = vsel %vm1400, %v1336, %v1464
    %v1529 = vsel %vm1401, %v1337, %v1465
    %v1530 = vsel %vm1402, %v1338, %v1466
    %v1531 = vsel %vm1403, %v1339, %v1467
    %v1532 = vsel %vm1404, %v1340, %v1468
    %v1533 = vsel %vm1405, %v1341, %v1469
    %v1534 = vsel %vm1406, %v1342, %v1470
    %v1535 = vsel %vm1407, %v1343, %v1471
    %v1536 = vsel %vm1408, %v1344, %v1472
    %v1537 = vsel %vm1409, %v1345, %v1473
    %1538 = vst.msk [vmem:[#allocation2] sm:$0xff] %vm740, %v1474
    %1539 = vst.msk [vmem:[#allocation2 + $0x8] sm:$0xff] %vm740, %v1475
    %1540 = vst.msk [vmem:[#allocation2 + $0x10] sm:$0xff] %vm740, %v1476
    %1541 = vst.msk [vmem:[#allocation2 + $0x18] sm:$0xff] %vm740, %v1477
    %1542 = vst.msk [vmem:[#allocation2 + $0x20] sm:$0xff] %vm740, %v1478
    %1543 = vst.msk [vmem:[#allocation2 + $0x28] sm:$0xff] %vm740, %v1479
    %1544 = vst.msk [vmem:[#allocation2 + $0x30] sm:$0xff] %vm740, %v1480
    %1545 = vst.msk [vmem:[#allocation2 + $0x38] sm:$0xff] %vm740, %v1481
    %1546 = vst.msk [vmem:[#allocation2 + $0x40] sm:$0xff] %vm740, %v1482
    %1547 = vst.msk [vmem:[#allocation2 + $0x48] sm:$0xff] %vm740, %v1483
    %1548 = vst.msk [vmem:[#allocation2 + $0x50] sm:$0xff] %vm740, %v1484
    %1549 = vst.msk [vmem:[#allocation2 + $0x58] sm:$0xff] %vm740, %v1485
    %1550 = vst.msk [vmem:[#allocation2 + $0x60] sm:$0xff] %vm740, %v1486
    %1551 = vst.msk [vmem:[#allocation2 + $0x68] sm:$0xff] %vm740, %v1487
    %1552 = vst.msk [vmem:[#allocation2 + $0x70] sm:$0xff] %vm740, %v1488
    %1553 = vst.msk [vmem:[#allocation2 + $0x78] sm:$0xff] %vm740, %v1489
    %1554 = vst.msk [vmem:[#allocation2 + $0x80] sm:$0xff] %vm740, %v1490
    %1555 = vst.msk [vmem:[#allocation2 + $0x88] sm:$0xff] %vm740, %v1491
    %1556 = vst.msk [vmem:[#allocation2 + $0x90] sm:$0xff] %vm740, %v1492
    %1557 = vst.msk [vmem:[#allocation2 + $0x98] sm:$0xff] %vm740, %v1493
    %1558 = vst.msk [vmem:[#allocation2 + $0xa0] sm:$0xff] %vm740, %v1494
    %1559 = vst.msk [vmem:[#allocation2 + $0xa8] sm:$0xff] %vm740, %v1495
    %1560 = vst.msk [vmem:[#allocation2 + $0xb0] sm:$0xff] %vm740, %v1496
    %1561 = vst.msk [vmem:[#allocation2 + $0xb8] sm:$0xff] %vm740, %v1497
    %1562 = vst.msk [vmem:[#allocation2 + $0xc0] sm:$0xff] %vm740, %v1498
    %1563 = vst.msk [vmem:[#allocation2 + $0xc8] sm:$0xff] %vm740, %v1499
    %1564 = vst.msk [vmem:[#allocation2 + $0xd0] sm:$0xff] %vm740, %v1500
    %1565 = vst.msk [vmem:[#allocation2 + $0xd8] sm:$0xff] %vm740, %v1501
    %1566 = vst.msk [vmem:[#allocation2 + $0xe0] sm:$0xff] %vm740, %v1502
    %1567 = vst.msk [vmem:[#allocation2 + $0xe8] sm:$0xff] %vm740, %v1503
    %1568 = vst.msk [vmem:[#allocation2 + $0xf0] sm:$0xff] %vm740, %v1504
    %1569 = vst.msk [vmem:[#allocation2 + $0xf8] sm:$0xff] %vm740, %v1505
    %1570 = vst.msk [vmem:[#allocation2 + $0x100] sm:$0xff] %vm740, %v1506
    %1571 = vst.msk [vmem:[#allocation2 + $0x108] sm:$0xff] %vm740, %v1507
    %1572 = vst.msk [vmem:[#allocation2 + $0x110] sm:$0xff] %vm740, %v1508
    %1573 = vst.msk [vmem:[#allocation2 + $0x118] sm:$0xff] %vm740, %v1509
    %1574 = vst.msk [vmem:[#allocation2 + $0x120] sm:$0xff] %vm740, %v1510
    %1575 = vst.msk [vmem:[#allocation2 + $0x128] sm:$0xff] %vm740, %v1511
    %1576 = vst.msk [vmem:[#allocation2 + $0x130] sm:$0xff] %vm740, %v1512
    %1577 = vst.msk [vmem:[#allocation2 + $0x138] sm:$0xff] %vm740, %v1513
    %1578 = vst.msk [vmem:[#allocation2 + $0x140] sm:$0xff] %vm740, %v1514
    %1579 = vst.msk [vmem:[#allocation2 + $0x148] sm:$0xff] %vm740, %v1515
    %1580 = vst.msk [vmem:[#allocation2 + $0x150] sm:$0xff] %vm740, %v1516
    %1581 = vst.msk [vmem:[#allocation2 + $0x158] sm:$0xff] %vm740, %v1517
    %1582 = vst.msk [vmem:[#allocation2 + $0x160] sm:$0xff] %vm740, %v1518
    %1583 = vst.msk [vmem:[#allocation2 + $0x168] sm:$0xff] %vm740, %v1519
    %1584 = vst.msk [vmem:[#allocation2 + $0x170] sm:$0xff] %vm740, %v1520
    %1585 = vst.msk [vmem:[#allocation2 + $0x178] sm:$0xff] %vm740, %v1521
    %1586 = vst.msk [vmem:[#allocation2 + $0x180] sm:$0xff] %vm740, %v1522
    %1587 = vst.msk [vmem:[#allocation2 + $0x188] sm:$0xff] %vm740, %v1523
    %1588 = vst.msk [vmem:[#allocation2 + $0x190] sm:$0xff] %vm740, %v1524
    %1589 = vst.msk [vmem:[#allocation2 + $0x198] sm:$0xff] %vm740, %v1525
    %1590 = vst.msk [vmem:[#allocation2 + $0x1a0] sm:$0xff] %vm740, %v1526
    %1591 = vst.msk [vmem:[#allocation2 + $0x1a8] sm:$0xff] %vm740, %v1527
    %1592 = vst.msk [vmem:[#allocation2 + $0x1b0] sm:$0xff] %vm740, %v1528
    %1593 = vst.msk [vmem:[#allocation2 + $0x1b8] sm:$0xff] %vm740, %v1529
    %1594 = vst.msk [vmem:[#allocation2 + $0x1c0] sm:$0xff] %vm740, %v1530
    %1595 = vst.msk [vmem:[#allocation2 + $0x1c8] sm:$0xff] %vm740, %v1531
    %1596 = vst.msk [vmem:[#allocation2 + $0x1d0] sm:$0xff] %vm740, %v1532
    %1597 = vst.msk [vmem:[#allocation2 + $0x1d8] sm:$0xff] %vm740, %v1533
    %1598 = vst.msk [vmem:[#allocation2 + $0x1e0] sm:$0xff] %vm740, %v1534
    %1599 = vst.msk [vmem:[#allocation2 + $0x1e8] sm:$0xff] %vm740, %v1535
    %1600 = vst.msk [vmem:[#allocation2 + $0x1f0] sm:$0xff] %vm740, %v1536
    %1601 = vst.msk [vmem:[#allocation2 + $0x1f8] sm:$0xff] %vm740, %v1537
    %v1602 = vld [vmem:[#allocation2] sm:$0xff]
    %v1603 = vld [vmem:[#allocation2 + $0x8] sm:$0xff]
    %v1604 = vld [vmem:[#allocation2 + $0x10] sm:$0xff]
    %v1605 = vld [vmem:[#allocation2 + $0x18] sm:$0xff]
    %v1606 = vld [vmem:[#allocation2 + $0x20] sm:$0xff]
    %v1607 = vld [vmem:[#allocation2 + $0x28] sm:$0xff]
    %v1608 = vld [vmem:[#allocation2 + $0x30] sm:$0xff]
    %v1609 = vld [vmem:[#allocation2 + $0x38] sm:$0xff]
    %v1610 = vld [vmem:[#allocation2 + $0x40] sm:$0xff]
    %v1611 = vld [vmem:[#allocation2 + $0x48] sm:$0xff]
    %v1612 = vld [vmem:[#allocation2 + $0x50] sm:$0xff]
    %v1613 = vld [vmem:[#allocation2 + $0x58] sm:$0xff]
    %v1614 = vld [vmem:[#allocation2 + $0x60] sm:$0xff]
    %v1615 = vld [vmem:[#allocation2 + $0x68] sm:$0xff]
    %v1616 = vld [vmem:[#allocation2 + $0x70] sm:$0xff]
    %v1617 = vld [vmem:[#allocation2 + $0x78] sm:$0xff]
    %v1618 = vld [vmem:[#allocation2 + $0x80] sm:$0xff]
    %v1619 = vld [vmem:[#allocation2 + $0x88] sm:$0xff]
    %v1620 = vld [vmem:[#allocation2 + $0x90] sm:$0xff]
    %v1621 = vld [vmem:[#allocation2 + $0x98] sm:$0xff]
    %v1622 = vld [vmem:[#allocation2 + $0xa0] sm:$0xff]
    %v1623 = vld [vmem:[#allocation2 + $0xa8] sm:$0xff]
    %v1624 = vld [vmem:[#allocation2 + $0xb0] sm:$0xff]
    %v1625 = vld [vmem:[#allocation2 + $0xb8] sm:$0xff]
    %v1626 = vld [vmem:[#allocation2 + $0xc0] sm:$0xff]
    %v1627 = vld [vmem:[#allocation2 + $0xc8] sm:$0xff]
    %v1628 = vld [vmem:[#allocation2 + $0xd0] sm:$0xff]
    %v1629 = vld [vmem:[#allocation2 + $0xd8] sm:$0xff]
    %v1630 = vld [vmem:[#allocation2 + $0xe0] sm:$0xff]
    %v1631 = vld [vmem:[#allocation2 + $0xe8] sm:$0xff]
    %v1632 = vld [vmem:[#allocation2 + $0xf0] sm:$0xff]
    %v1633 = vld [vmem:[#allocation2 + $0xf8] sm:$0xff]
    %v1634 = vmax.f32 %v1602, %v1618
    %v1635 = vmax.f32 %v1603, %v1619
    %v1636 = vmax.f32 %v1604, %v1620
    %v1637 = vmax.f32 %v1605, %v1621
    %v1638 = vmax.f32 %v1606, %v1622
    %v1639 = vmax.f32 %v1607, %v1623
    %v1640 = vmax.f32 %v1608, %v1624
    %v1641 = vmax.f32 %v1609, %v1625
    %v1642 = vmax.f32 %v1610, %v1626
    %v1643 = vmax.f32 %v1611, %v1627
    %v1644 = vmax.f32 %v1612, %v1628
    %v1645 = vmax.f32 %v1613, %v1629
    %v1646 = vmax.f32 %v1614, %v1630
    %v1647 = vmax.f32 %v1615, %v1631
    %v1648 = vmax.f32 %v1616, %v1632
    %v1649 = vmax.f32 %v1617, %v1633
    %v1650 = vld [vmem:[#allocation2 + $0x100] sm:$0xff]
    %v1651 = vld [vmem:[#allocation2 + $0x108] sm:$0xff]
    %v1652 = vld [vmem:[#allocation2 + $0x110] sm:$0xff]
    %v1653 = vld [vmem:[#allocation2 + $0x118] sm:$0xff]
    %v1654 = vld [vmem:[#allocation2 + $0x120] sm:$0xff]
    %v1655 = vld [vmem:[#allocation2 + $0x128] sm:$0xff]
    %v1656 = vld [vmem:[#allocation2 + $0x130] sm:$0xff]
    %v1657 = vld [vmem:[#allocation2 + $0x138] sm:$0xff]
    %v1658 = vld [vmem:[#allocation2 + $0x140] sm:$0xff]
    %v1659 = vld [vmem:[#allocation2 + $0x148] sm:$0xff]
    %v1660 = vld [vmem:[#allocation2 + $0x150] sm:$0xff]
    %v1661 = vld [vmem:[#allocation2 + $0x158] sm:$0xff]
    %v1662 = vld [vmem:[#allocation2 + $0x160] sm:$0xff]
    %v1663 = vld [vmem:[#allocation2 + $0x168] sm:$0xff]
    %v1664 = vld [vmem:[#allocation2 + $0x170] sm:$0xff]
    %v1665 = vld [vmem:[#allocation2 + $0x178] sm:$0xff]
    %v1666 = vmax.f32 %v1634, %v1650
    %v1667 = vmax.f32 %v1635, %v1651
    %v1668 = vmax.f32 %v1636, %v1652
    %v1669 = vmax.f32 %v1637, %v1653
    %v1670 = vmax.f32 %v1638, %v1654
    %v1671 = vmax.f32 %v1639, %v1655
    %v1672 = vmax.f32 %v1640, %v1656
    %v1673 = vmax.f32 %v1641, %v1657
    %v1674 = vmax.f32 %v1642, %v1658
    %v1675 = vmax.f32 %v1643, %v1659
    %v1676 = vmax.f32 %v1644, %v1660
    %v1677 = vmax.f32 %v1645, %v1661
    %v1678 = vmax.f32 %v1646, %v1662
    %v1679 = vmax.f32 %v1647, %v1663
    %v1680 = vmax.f32 %v1648, %v1664
    %v1681 = vmax.f32 %v1649, %v1665
    %v1682 = vld [vmem:[#allocation2 + $0x180] sm:$0xff]
    %v1683 = vld [vmem:[#allocation2 + $0x188] sm:$0xff]
    %v1684 = vld [vmem:[#allocation2 + $0x190] sm:$0xff]
    %v1685 = vld [vmem:[#allocation2 + $0x198] sm:$0xff]
    %v1686 = vld [vmem:[#allocation2 + $0x1a0] sm:$0xff]
    %v1687 = vld [vmem:[#allocation2 + $0x1a8] sm:$0xff]
    %v1688 = vld [vmem:[#allocation2 + $0x1b0] sm:$0xff]
    %v1689 = vld [vmem:[#allocation2 + $0x1b8] sm:$0xff]
    %v1690 = vld [vmem:[#allocation2 + $0x1c0] sm:$0xff]
    %v1691 = vld [vmem:[#allocation2 + $0x1c8] sm:$0xff]
    %v1692 = vld [vmem:[#allocation2 + $0x1d0] sm:$0xff]
    %v1693 = vld [vmem:[#allocation2 + $0x1d8] sm:$0xff]
    %v1694 = vld [vmem:[#allocation2 + $0x1e0] sm:$0xff]
    %v1695 = vld [vmem:[#allocation2 + $0x1e8] sm:$0xff]
    %v1696 = vld [vmem:[#allocation2 + $0x1f0] sm:$0xff]
    %v1697 = vld [vmem:[#allocation2 + $0x1f8] sm:$0xff]
    %v1698 = vmax.f32 %v1666, %v1682
    %v1699 = vmax.f32 %v1667, %v1683
    %v1700 = vmax.f32 %v1668, %v1684
    %v1701 = vmax.f32 %v1669, %v1685
    %v1702 = vmax.f32 %v1670, %v1686
    %v1703 = vmax.f32 %v1671, %v1687
    %v1704 = vmax.f32 %v1672, %v1688
    %v1705 = vmax.f32 %v1673, %v1689
    %v1706 = vmax.f32 %v1674, %v1690
    %v1707 = vmax.f32 %v1675, %v1691
    %v1708 = vmax.f32 %v1676, %v1692
    %v1709 = vmax.f32 %v1677, %v1693
    %v1710 = vmax.f32 %v1678, %v1694
    %v1711 = vmax.f32 %v1679, %v1695
    %v1712 = vmax.f32 %v1680, %v1696
    %v1713 = vmax.f32 %v1681, %v1697
    %1714 = vst.msk [vmem:[#allocation12] sm:$0xff] %vm740, %v1698
    %1715 = vst.msk [vmem:[#allocation12 + $0x8] sm:$0xff] %vm740, %v1699
    %1716 = vst.msk [vmem:[#allocation12 + $0x10] sm:$0xff] %vm740, %v1700
    %1717 = vst.msk [vmem:[#allocation12 + $0x18] sm:$0xff] %vm740, %v1701
    %1718 = vst.msk [vmem:[#allocation12 + $0x20] sm:$0xff] %vm740, %v1702
    %1719 = vst.msk [vmem:[#allocation12 + $0x28] sm:$0xff] %vm740, %v1703
    %1720 = vst.msk [vmem:[#allocation12 + $0x30] sm:$0xff] %vm740, %v1704
    %1721 = vst.msk [vmem:[#allocation12 + $0x38] sm:$0xff] %vm740, %v1705
    %1722 = vst.msk [vmem:[#allocation12 + $0x40] sm:$0xff] %vm740, %v1706
    %1723 = vst.msk [vmem:[#allocation12 + $0x48] sm:$0xff] %vm740, %v1707
    %1724 = vst.msk [vmem:[#allocation12 + $0x50] sm:$0xff] %vm740, %v1708
    %1725 = vst.msk [vmem:[#allocation12 + $0x58] sm:$0xff] %vm740, %v1709
    %1726 = vst.msk [vmem:[#allocation12 + $0x60] sm:$0xff] %vm740, %v1710
    %1727 = vst.msk [vmem:[#allocation12 + $0x68] sm:$0xff] %vm740, %v1711
    %1728 = vst.msk [vmem:[#allocation12 + $0x70] sm:$0xff] %vm740, %v1712
    %1729 = vst.msk [vmem:[#allocation12 + $0x78] sm:$0xff] %vm740, %v1713
    // Predicated region
    $region42: #{tpu_custom_call.1} parent=1 // pred_check
      _
    $region43: #{tpu_custom_call.1} parent=1 // pred_check_branch
      %1731 = sbr.rel (0) target = $region45
    $region44: #{tpu_custom_call.1} parent=1 // pred_region
      %s1733 = ssub.s32 2048, 2048
      %1734 = vsyncadd [#allocation5], %s1733
      %s1735 = sshll.u32 [#allocation12], 4
      %s1736 = int_to_ptr.vmem [resolvable:$true] %s1735
      %1741 = dma.vmem_to_hbm [thread:$0]  %s1736, 2048, %s5, [#allocation5], 128, 128, 8
    $region45: #{tpu_custom_call.1} parent=1 // pred_fallthru
      _
    // Predicated region
    $region46: #{tpu_custom_call.1} parent=1 // pred_check
      _
    $region47: #{tpu_custom_call.1} parent=1 // pred_check_branch
      %1743 = sbr.rel (0) target = $region49
    $region48: #{tpu_custom_call.1} parent=1 // pred_region
      %1744 = dma.done [#allocation5], 2048
    $region49: #{tpu_custom_call.1} parent=1 // pred_fallthru
      _
    %1745 = vsyncpa [#allocation4], 1
    %1746 = vsyncpa [#allocation7], 1
    %1747 = vsyncpa [#allocation10], 1
    %1748 = vsyncpa [#allocation5], 1

</llo_original>
